<compile_context>
chip_gen: v7x
topology: tpu7x:2x2x1
jax: 0.10.0
libtpu: 0.0.40
codegen_flags: <defaults>
</compile_context>

<pallas_src>
import math

import jax
import jax.numpy as jnp
from jax import lax
from jax.experimental import pallas as pl
from jax.experimental.pallas import tpu as pltpu

C1 = 256   # init_reduce_dim / fc1 / batch_norm1 width (fixed by the module)
C2 = 512   # reduce_dim width (fixed by the module)
NB = 3     # number of weighted input tensors


def _round_up(x, m):
    return (x + m - 1) // m * m


def _make_kernel_a(TB, B_real):
    """Pass 1: folded (init_reduce->reduce_dim) -> fc1, plus per-tile BN partial stats."""

    def kernel(x0_ref, x1_ref, x2_ref, wf_ref, w1_ref, b1_ref, a_ref, stats_ref):
        # x*_ref:    [TB, T*F]      lane-dense batch-tile slabs (one per branch)
        # wf_ref:    [3, T*F, 512]  scale-folded init_reduce @ reduce_dim weights
        # w1_ref:    [512, 256]     fc1 weight (transposed)
        # b1_ref:    [1, 256]       all three Linear biases folded through the chain
        # a_ref:     [TB, 256]      pre-BN activations (output)
        # stats_ref: [1, 2, 256]    this tile's masked sum / sum-of-squares (output)
        cdt = wf_ref.dtype   # MXU compute dtype (bf16 on the perf path)

        red = jnp.dot(x0_ref[...].astype(cdt), wf_ref[0],
                      preferred_element_type=jnp.float32)              # [TB, 512]
        red += jnp.dot(x1_ref[...].astype(cdt), wf_ref[1],
                       preferred_element_type=jnp.float32)
        red += jnp.dot(x2_ref[...].astype(cdt), wf_ref[2],
                       preferred_element_type=jnp.float32)
        a = jnp.dot(red.astype(cdt), w1_ref[...],
                    preferred_element_type=jnp.float32) + b1_ref[...]  # [TB, 256]
        a_ref[...] = a

        # Masked per-channel sum / sum-of-squares on the MXU (ones-matmul), emitted
        # as a per-tile partial so the grid axis stays "parallel" (megacore on v7x).
        row = pl.program_id(0) * TB + lax.broadcasted_iota(jnp.int32, (1, TB), 1)
        valid = (row < B_real).astype(jnp.float32)                     # [1, TB]
        s = jnp.dot(valid, a, preferred_element_type=jnp.float32)      # [1, 256]
        ss = jnp.dot(valid, a * a, preferred_element_type=jnp.float32)
        stats_ref[0] = jnp.concatenate([s, ss], axis=0)                # [2, 256]

    return kernel


def _bn_fc2_kernel(a_ref, ss_ref, w2_ref, b2_ref, o_ref):
    """Pass 2: precomputed BN scale/shift + ReLU + fc2 (lane-dense padded output)."""
    # TODO(synk): nn.Dropout(0.5) training-mode random mask and BatchNorm1d
    # running_mean/running_var buffer updates are not emitted (forward output parity
    # only; dropout treated as identity).
    y = jnp.maximum(a_ref[...] * ss_ref[0:1, :] + ss_ref[1:2, :], 0.0)
    o_ref[...] = (jnp.dot(y.astype(w2_ref.dtype), w2_ref[...],
                          preferred_element_type=jnp.float32)
                  + b2_ref[...]).astype(o_ref.dtype)


def weighted_attribute_prediction_forward(tensors, params, *,
                                          deeper_layer_weight=0.5, eps=1e-5,
                                          compute_dtype=jnp.bfloat16):
    """Forward of WeightedAttributePrediction. tensors: 3 x [B, T, F] -> [B, num_attr]."""
    t0, t1, t2 = [jnp.asarray(t, jnp.float32) for t in tensors]
    B, T, F = t0.shape
    d = float(deeper_layer_weight)
    scales = jnp.asarray([(1.0 - d) / 2.0, (1.0 - d) / 2.0, d], jnp.float32)

    init_w = params["init_w"].astype(jnp.float32)    # [256, F]
    init_b = params["init_b"].astype(jnp.float32)    # [256]
    red_w = params["reduce_w"].astype(jnp.float32)   # [512, T*3*256]
    red_b = params["reduce_b"].astype(jnp.float32)   # [512]
    fc1_w = params["fc1_w"].astype(jnp.float32)      # [256, 512]
    fc1_b = params["fc1_b"].astype(jnp.float32)      # [256]
    gamma = params["bn_gamma"].astype(jnp.float32)   # [256]
    beta = params["bn_beta"].astype(jnp.float32)     # [256]
    fc2_w = params["fc2_w"].astype(jnp.float32)      # [A, 256]
    fc2_b = params["fc2_b"].astype(jnp.float32)      # [A]
    A = fc2_w.shape[0]
    hi = lax.Precision.HIGHEST   # one-time weight folds are done in exact f32

    # ---- algebraic fold: init_reduce -> reduce_dim (tiny, once per call, plain XLA) ----
    #   red = sum_i  X_i[B, T*F] @ Wf_i[T*F, 512]   with
    #   Wf_i[t*F + f, c] = s_i * sum_k init_w[k, f] * red_w[c, (t*3+i)*256 + k]
    wr4 = red_w.reshape(C2, T, NB, C1)                                # [512, T, 3, 256]
    wf = jnp.einsum('kf,ctik->itfc', init_w, wr4, precision=hi)       # [3, T, F, 512]
    wf = (wf * scales[:, None, None, None]).reshape(NB, T * F, C2)
    red_bias = red_b + jnp.dot(red_w, jnp.tile(init_b, T * NB), precision=hi)  # [512]
    w1 = fc1_w.T                                                      # [512, 256]
    b1_eff = (fc1_b + jnp.dot(fc1_w, red_bias, precision=hi)).reshape(1, C1)
    A_pad = _round_up(max(A, 1), 128)                                 # lane-dense output
    w2 = jnp.zeros((C1, A_pad), jnp.float32).at[:, :A].set(fc2_w.T)
    b2 = jnp.zeros((1, A_pad), jnp.float32).at[:, :A].set(fc2_b)
    wf = wf.astype(compute_dtype)   # bf16 MXU operands (f32 accumulation in-kernel)
    w1 = w1.astype(compute_dtype)
    w2 = w2.astype(compute_dtype)

    # ---- batch tiling (256-row tiles fill the 256-wide MXUs on v6e / v7x) ----
    TB = min(256, _round_up(B, 8))
    B_pad = _round_up(B, TB)
    n_tiles = B_pad // TB
    K = T * F

    def prep(t):  # zero-pad batch; [B,T,F] -> [B_pad, T*F] is a free, lane-dense reshape
        return jnp.pad(t, ((0, B_pad - B), (0, 0), (0, 0))).reshape(B_pad, K)

    x0, x1, x2 = prep(t0), prep(t1), prep(t2)

    def const(shape):
        return pl.BlockSpec(shape, lambda i: (0,) * len(shape))

    # ---- pass 1: folded matmuls + per-tile BN partial statistics ----
    a_pre, part_stats = pl.pallas_call(
        _make_kernel_a(TB, B),
        out_shape=(jax.ShapeDtypeStruct((B_pad, C1), jnp.float32),
                   jax.ShapeDtypeStruct((n_tiles, 2, C1), jnp.float32)),
        grid=(n_tiles,),
        in_specs=[pl.BlockSpec((TB, K), lambda i: (i, 0)),
                  pl.BlockSpec((TB, K), lambda i: (i, 0)),
                  pl.BlockSpec((TB, K), lambda i: (i, 0)),
                  const((NB, K, C2)),
                  const((C2, C1)),
                  const((1, C1))],
        out_specs=(pl.BlockSpec((TB, C1), lambda i: (i, 0)),
                   pl.BlockSpec((1, 2, C1), lambda i: (i, 0, 0))),
        compiler_params=pltpu.CompilerParams(
            dimension_semantics=("parallel",),         # shards batch tiles across TCs on v7x
            vmem_limit_bytes=48 * 1024 * 1024),        # safe on v5e/v6e (128 MiB) and v7x (64 MiB)
    )(x0, x1, x2, wf, w1, b1_eff)

    # ---- cross-tile reduction + BN scale/shift precompute (tiny, plain XLA) ----
    stats = jnp.sum(part_stats, axis=0)                               # [2, 256]
    mean = stats[0] / B
    var = jnp.maximum(stats[1] / B - mean * mean, 0.0)                # biased (train-mode BN)
    scale = gamma * lax.rsqrt(var + eps)
    shift = beta - mean * scale
    scale_shift = jnp.stack([scale, shift], axis=0)                   # [2, 256]

    # ---- pass 2: BN (precomputed affine) + ReLU + fc2 ----
    out = pl.pallas_call(
        _bn_fc2_kernel,
        out_shape=jax.ShapeDtypeStruct((B_pad, A_pad), jnp.float32),
        grid=(n_tiles,),
        in_specs=[pl.BlockSpec((TB, C1), lambda i: (i, 0)),
                  const((2, C1)),
                  const((C1, A_pad)),
                  const((1, A_pad))],
        out_specs=pl.BlockSpec((TB, A_pad), lambda i: (i, 0)),
        compiler_params=pltpu.CompilerParams(dimension_semantics=("parallel",)),
    )(a_pre, scale_shift, w2, b2)

    return out[:B, :A]


def weighted_attribute_prediction_ref(tensors, params, *,
                                      deeper_layer_weight=0.5, eps=1e-5):
    """Pure-JAX reference mirroring the PyTorch module (train-mode BN, no dropout)."""
    d = deeper_layer_weight
    scales = ((1.0 - d) / 2.0, (1.0 - d) / 2.0, d)
    reduced = [(t * s) @ params["init_w"].T + params["init_b"]
               for t, s in zip(tensors, scales)]
    conc = jnp.concatenate(reduced, axis=-1)                 # [B, T, 768]
    flat = conc.reshape(conc.shape[0], -1)                   # [B, T*768]
    red = flat @ params["reduce_w"].T + params["reduce_b"]   # [B, 512]
    a = red @ params["fc1_w"].T + params["fc1_b"]            # [B, 256]
    mean = a.mean(axis=0, keepdims=True)
    var = ((a - mean) ** 2).mean(axis=0, keepdims=True)      # biased, train-mode BN
    y = (a - mean) / jnp.sqrt(var + eps) * params["bn_gamma"] + params["bn_beta"]
    y = jnp.maximum(y, 0.0)
    return y @ params["fc2_w"].T + params["fc2_b"]


if __name__ == "__main__":
    # Small shapes consistent with the module: 3 tensors of [B, num_tokens, feature_dim].
    B, T, F, A = 4, 8, 32, 16
    d = 0.5

    key = jax.random.PRNGKey(0)
    ks = jax.random.split(key, 11)

    def uniform(k, shape, bound):
        return jax.random.uniform(k, shape, jnp.float32, -bound, bound)

    tensors = [jax.random.normal(ks[i], (B, T, F), jnp.float32) for i in range(3)]

    params = {
        "init_w": uniform(ks[3], (C1, F), 1.0 / math.sqrt(F)),
        "init_b": uniform(ks[4], (C1,), 1.0 / math.sqrt(F)),
        "reduce_w": uniform(ks[5], (C2, T * NB * C1), 1.0 / math.sqrt(T * NB * C1)),
        "reduce_b": uniform(ks[6], (C2,), 1.0 / math.sqrt(T * NB * C1)),
        "fc1_w": uniform(ks[7], (C1, C2), 1.0 / math.sqrt(C2)),
        "fc1_b": uniform(ks[8], (C1,), 1.0 / math.sqrt(C2)),
        "bn_gamma": jnp.ones((C1,), jnp.float32),
        "bn_beta": jnp.zeros((C1,), jnp.float32),
        "fc2_w": uniform(ks[9], (A, C1), 1.0 / math.sqrt(C1)),
        "fc2_b": uniform(ks[10], (A,), 1.0 / math.sqrt(C1)),
    }

    ref = weighted_attribute_prediction_ref(tensors, params, deeper_layer_weight=d)

    # Full-precision MXU path: tight parity with the f32 reference.
    out_f32 = jax.block_until_ready(
        weighted_attribute_prediction_forward(tensors, params, deeper_layer_weight=d,
                                              compute_dtype=jnp.float32))
    assert out_f32.shape == (B, A), out_f32.shape
    err_f32 = float(jnp.max(jnp.abs(out_f32 - ref)))
    assert jnp.allclose(out_f32, ref, atol=2e-3, rtol=2e-3), err_f32

    # bf16 MXU path (default / perf path): bf16 operand quantization (~0.4% relative)
    # is amplified by the small-batch BatchNorm, so the tolerance is looser.
    out_bf16 = jax.block_until_ready(
        weighted_attribute_prediction_forward(tensors, params, deeper_layer_weight=d))
    assert out_bf16.shape == (B, A), out_bf16.shape
    err_bf16 = float(jnp.max(jnp.abs(out_bf16 - ref)))
    assert jnp.allclose(out_bf16, ref, atol=5e-2, rtol=5e-2), err_bf16

    print("KERNEL_OK")
</pallas_src>

<mosaic_0001>
module attributes {stable_mosaic.version = 11 : i64} {
  func.func @kernel(%arg0: i32, %arg1: memref<8x256xf32, #tpu.memory_space<vmem>>, %arg2: memref<8x256xf32, #tpu.memory_space<vmem>>, %arg3: memref<8x256xf32, #tpu.memory_space<vmem>>, %arg4: memref<3x256x512xf32, #tpu.memory_space<vmem>>, %arg5: memref<512x256xf32, #tpu.memory_space<vmem>>, %arg6: memref<1x256xf32, #tpu.memory_space<vmem>>, %arg7: memref<8x256xf32, #tpu.memory_space<vmem>>, %arg8: memref<1x2x256xf32, #tpu.memory_space<vmem>>) attributes {dimension_semantics = [#tpu.dimension_semantics<parallel>], iteration_bounds = array<i64: 1>, scalar_prefetch = 0 : i64, scratch_operands = 0 : i64, tpu.core_type = #tpu.core_type<tc>, window_params = [{transform_indices = @transform_0, window_bounds = array<i64: 8, 256>}, {transform_indices = @transform_1, window_bounds = array<i64: 8, 256>}, {transform_indices = @transform_2, window_bounds = array<i64: 8, 256>}, {pipeline_mode = #tpu.pipeline_mode<synchronous>, transform_indices = @transform_3, window_bounds = array<i64: 3, 256, 512>}, {pipeline_mode = #tpu.pipeline_mode<synchronous>, transform_indices = @transform_4, window_bounds = array<i64: 512, 256>}, {pipeline_mode = #tpu.pipeline_mode<synchronous>, transform_indices = @transform_5, window_bounds = array<i64: 1, 256>}, {transform_indices = @transform_6, window_bounds = array<i64: 8, 256>}, {transform_indices = @transform_7, window_bounds = array<i64: 1, 2, 256>}]} {
    %c0 = arith.constant 0 : index
    %c0_0 = arith.constant 0 : index
    %0 = vector.load %arg1[%c0, %c0_0] : memref<8x256xf32, #tpu.memory_space<vmem>>, vector<8x256xf32>
    %c0_1 = arith.constant 0 : index
    %c0_2 = arith.constant 0 : index
    %c0_3 = arith.constant 0 : index
    %1 = vector.load %arg4[%c0_1, %c0_2, %c0_3] : memref<3x256x512xf32, #tpu.memory_space<vmem>>, vector<1x256x512xf32>
    %2 = vector.shape_cast %1 : vector<1x256x512xf32> to vector<256x512xf32>
    %cst = arith.constant dense<0.000000e+00> : vector<8x512xf32>
    %3 = tpu.matmul %0, %2, %cst {dimension_numbers = #tpu.dot_dimension_numbers<[1], [0], [0], [1], [0, 0, 1, 1], [], []>} : vector<8x256xf32>, vector<256x512xf32>, vector<8x512xf32> -> vector<8x512xf32>
    %c0_4 = arith.constant 0 : index
    %c0_5 = arith.constant 0 : index
    %4 = vector.load %arg2[%c0_4, %c0_5] : memref<8x256xf32, #tpu.memory_space<vmem>>, vector<8x256xf32>
    %c1 = arith.constant 1 : index
    %c0_6 = arith.constant 0 : index
    %c0_7 = arith.constant 0 : index
    %5 = vector.load %arg4[%c1, %c0_6, %c0_7] : memref<3x256x512xf32, #tpu.memory_space<vmem>>, vector<1x256x512xf32>
    %6 = vector.shape_cast %5 : vector<1x256x512xf32> to vector<256x512xf32>
    %cst_8 = arith.constant dense<0.000000e+00> : vector<8x512xf32>
    %7 = tpu.matmul %4, %6, %cst_8 {dimension_numbers = #tpu.dot_dimension_numbers<[1], [0], [0], [1], [0, 0, 1, 1], [], []>} : vector<8x256xf32>, vector<256x512xf32>, vector<8x512xf32> -> vector<8x512xf32>
    %8 = arith.addf %3, %7 : vector<8x512xf32>
    %c0_9 = arith.constant 0 : index
    %c0_10 = arith.constant 0 : index
    %9 = vector.load %arg3[%c0_9, %c0_10] : memref<8x256xf32, #tpu.memory_space<vmem>>, vector<8x256xf32>
    %c2 = arith.constant 2 : index
    %c0_11 = arith.constant 0 : index
    %c0_12 = arith.constant 0 : index
    %10 = vector.load %arg4[%c2, %c0_11, %c0_12] : memref<3x256x512xf32, #tpu.memory_space<vmem>>, vector<1x256x512xf32>
    %11 = vector.shape_cast %10 : vector<1x256x512xf32> to vector<256x512xf32>
    %cst_13 = arith.constant dense<0.000000e+00> : vector<8x512xf32>
    %12 = tpu.matmul %9, %11, %cst_13 {dimension_numbers = #tpu.dot_dimension_numbers<[1], [0], [0], [1], [0, 0, 1, 1], [], []>} : vector<8x256xf32>, vector<256x512xf32>, vector<8x512xf32> -> vector<8x512xf32>
    %13 = arith.addf %8, %12 : vector<8x512xf32>
    %c0_14 = arith.constant 0 : index
    %c0_15 = arith.constant 0 : index
    %14 = vector.load %arg5[%c0_14, %c0_15] : memref<512x256xf32, #tpu.memory_space<vmem>>, vector<512x256xf32>
    %cst_16 = arith.constant dense<0.000000e+00> : vector<8x256xf32>
    %15 = tpu.matmul %13, %14, %cst_16 {dimension_numbers = #tpu.dot_dimension_numbers<[1], [0], [0], [1], [0, 0, 1, 1], [], []>} : vector<8x512xf32>, vector<512x256xf32>, vector<8x256xf32> -> vector<8x256xf32>
    %c0_17 = arith.constant 0 : index
    %c0_18 = arith.constant 0 : index
    %16 = vector.load %arg6[%c0_17, %c0_18] : memref<1x256xf32, #tpu.memory_space<vmem>>, vector<1x256xf32>
    %17 = vector.broadcast %16 : vector<1x256xf32> to vector<8x256xf32>
    %18 = arith.addf %15, %17 : vector<8x256xf32>
    %c0_19 = arith.constant 0 : index
    %c0_20 = arith.constant 0 : index
    %19 = vector.load %arg7[%c0_19, %c0_20] : memref<8x256xf32, #tpu.memory_space<vmem>>, vector<8x256xf32>
    tpu.vector_store %arg7[%c0_19, %c0_20], %18 {strides = array<i32>} : memref<8x256xf32, #tpu.memory_space<vmem>>, vector<8x256xf32>,
    %c8_i32 = arith.constant 8 : i32
    %20 = arith.muli %arg0, %c8_i32 : i32
    %21 = tpu.iota {dimensions = array<i32: 1>} : vector<1x8xi32>
    %22 = vector.broadcast %20 : i32 to vector<1x8xi32>
    %23 = arith.addi %22, %21 : vector<1x8xi32>
    %c4_i32 = arith.constant 4 : i32
    %24 = vector.broadcast %c4_i32 : i32 to vector<1x8xi32>
    %25 = arith.cmpi slt, %23, %24 : vector<1x8xi32>
    %26 = arith.extui %25 : vector<1x8xi1> to vector<1x8xi32>
    %27 = arith.sitofp %26 : vector<1x8xi32> to vector<1x8xf32>
    %cst_21 = arith.constant dense<0.000000e+00> : vector<1x256xf32>
    %28 = tpu.matmul %27, %18, %cst_21 {dimension_numbers = #tpu.dot_dimension_numbers<[1], [0], [0], [1], [0, 0, 1, 1], [], []>} : vector<1x8xf32>, vector<8x256xf32>, vector<1x256xf32> -> vector<1x256xf32>
    %29 = arith.mulf %18, %18 : vector<8x256xf32>
    %cst_22 = arith.constant dense<0.000000e+00> : vector<1x256xf32>
    %30 = tpu.matmul %27, %29, %cst_22 {dimension_numbers = #tpu.dot_dimension_numbers<[1], [0], [0], [1], [0, 0, 1, 1], [], []>} : vector<1x8xf32>, vector<8x256xf32>, vector<1x256xf32> -> vector<1x256xf32>
    %31 = tpu.concatenate %28, %30 in 0 : vector<1x256xf32>, vector<1x256xf32> -> vector<2x256xf32>
    %c0_23 = arith.constant 0 : index
    %c0_24 = arith.constant 0 : index
    %c0_25 = arith.constant 0 : index
    %32 = vector.load %arg8[%c0_23, %c0_24, %c0_25] : memref<1x2x256xf32, #tpu.memory_space<vmem>>, vector<1x2x256xf32>
    %33 = vector.shape_cast %32 : vector<1x2x256xf32> to vector<2x256xf32>
    %34 = vector.shape_cast %31 : vector<2x256xf32> to vector<1x2x256xf32>
    tpu.vector_store %arg8[%c0_23, %c0_24, %c0_25], %34 {strides = array<i32>} : memref<1x2x256xf32, #tpu.memory_space<vmem>>, vector<1x2x256xf32>,
    return
  }
  func.func @transform_0(%arg0: i32) -> (i32, i32) {
    %c0_i32 = arith.constant 0 : i32
    %c0_i32_0 = arith.constant 0 : i32
    return %arg0, %c0_i32 : i32, i32
  }
  func.func @transform_1(%arg0: i32) -> (i32, i32) {
    %c0_i32 = arith.constant 0 : i32
    %c0_i32_0 = arith.constant 0 : i32
    return %arg0, %c0_i32 : i32, i32
  }
  func.func @transform_2(%arg0: i32) -> (i32, i32) {
    %c0_i32 = arith.constant 0 : i32
    %c0_i32_0 = arith.constant 0 : i32
    return %arg0, %c0_i32 : i32, i32
  }
  func.func @transform_3(%arg0: i32) -> (i32, i32, i32) {
    %c0_i32 = arith.constant 0 : i32
    %c0_i32_0 = arith.constant 0 : i32
    %c0_i32_1 = arith.constant 0 : i32
    %c0_i32_2 = arith.constant 0 : i32
    return %c0_i32, %c0_i32_0, %c0_i32_1 : i32, i32, i32
  }
  func.func @transform_4(%arg0: i32) -> (i32, i32) {
    %c0_i32 = arith.constant 0 : i32
    %c0_i32_0 = arith.constant 0 : i32
    %c0_i32_1 = arith.constant 0 : i32
    return %c0_i32, %c0_i32_0 : i32, i32
  }
  func.func @transform_5(%arg0: i32) -> (i32, i32) {
    %c0_i32 = arith.constant 0 : i32
    %c0_i32_0 = arith.constant 0 : i32
    %c0_i32_1 = arith.constant 0 : i32
    return %c0_i32, %c0_i32_0 : i32, i32
  }
  func.func @transform_6(%arg0: i32) -> (i32, i32) {
    %c0_i32 = arith.constant 0 : i32
    %c0_i32_0 = arith.constant 0 : i32
    return %arg0, %c0_i32 : i32, i32
  }
  func.func @transform_7(%arg0: i32) -> (i32, i32, i32) {
    %c0_i32 = arith.constant 0 : i32
    %c0_i32_0 = arith.constant 0 : i32
    %c0_i32_1 = arith.constant 0 : i32
    return %arg0, %c0_i32, %c0_i32_0 : i32, i32, i32
  }
}

</mosaic_0001>

<llo_original>
// kernel: tpu_custom_call.1
$region0: #{tpu_custom_call.1}
  #allocation0 [shape = 'u32[]', space=smem, size = 0x4, offset = 0x4, fixed_abs, tag = 'smem constant byte address 0x4 - core index']
  #allocation1 [shape = 'u32[144,128]{1,0:T(1,128)}', space=vmem, size = 0x12000, scoped, tag = 'internal scratch']
  %s0 = inlined_call_operand.hbm [shape: f32[8,256], index: 0, kind: input, shape index: {}]
  %s1 = inlined_call_operand.hbm [shape: f32[8,256], index: 1, kind: input, shape index: {}]
  %s2 = inlined_call_operand.hbm [shape: f32[8,256], index: 2, kind: input, shape index: {}]
  %s3 = inlined_call_operand.hbm [shape: f32[3,256,512], index: 3, kind: input, shape index: {}]
  %s4 = inlined_call_operand.hbm [shape: f32[512,256], index: 4, kind: input, shape index: {}]
  %s5 = inlined_call_operand.hbm [shape: f32[1,256], index: 5, kind: input, shape index: {}]
  %s6 = inlined_call_operand.hbm [shape: f32[8,256], index: 6, kind: output, shape index: {0}]
  %s7 = inlined_call_operand.hbm [shape: f32[1,2,256], index: 7, kind: output, shape index: {1}]
  %8 = xla_tuple %s6, %s7
  %s9 = sld [smem:[#allocation0]]
  $region66: #{tpu_custom_call.1} parent=0
    _
  %s11 = ssub.s32 1, %s9
  %s12 = scalar_select 0, %s11, %s9
  $region1: #{tpu_custom_call.1} parent=0
    #allocation2 [shape = 'u8[8192]{0}', space=vmem, size = 0x2000, scoped, tag = 'input window, operand 0, single buffered']
    #allocation3 [shape = 's32[1]{0}', space=sflag, size = 0x4, scoped, tag = 'scoped memory for tpu_custom_call.1']
    #allocation4 [shape = 's32[1]{0}', space=sflag, size = 0x4, scoped, tag = 'scoped memory for tpu_custom_call.1']
    #allocation5 [shape = 'u8[8192]{0}', space=vmem, size = 0x2000, scoped, tag = 'input window, operand 1, single buffered']
    #allocation6 [shape = 's32[1]{0}', space=sflag, size = 0x4, scoped, tag = 'scoped memory for tpu_custom_call.1']
    #allocation7 [shape = 'u8[8192]{0}', space=vmem, size = 0x2000, scoped, tag = 'input window, operand 2, single buffered']
    #allocation8 [shape = 'u8[1572864]{0}', space=vmem, size = 0x180000, scoped, tag = 'input window, operand 3, single buffered']
    #allocation9 [shape = 's32[1]{0}', space=sflag, size = 0x4, scoped, tag = 'scoped memory for tpu_custom_call.1']
    #allocation10 [shape = 'u8[524288]{0}', space=vmem, size = 0x80000, scoped, tag = 'input window, operand 4, single buffered']
    #allocation11 [shape = 'u8[1024]{0}', space=vmem, size = 0x400, scoped, tag = 'input window, operand 5, single buffered']
    #allocation12 [shape = 's32[1]{0}', space=sflag, size = 0x4, scoped, tag = 'scoped memory for tpu_custom_call.1']
    #allocation13 [shape = 'u8[8192]{0}', space=vmem, size = 0x2000, scoped, tag = 'output window, operand 0, single buffered']
    #allocation14 [shape = 'u8[2048]{0}', space=vmem, size = 0x800, scoped, tag = 'output window, operand 1, single buffered']
    #allocation15 [shape = 's32[1]{0}', space=sflag, size = 0x4, scoped, tag = 'scoped memory for tpu_custom_call.1']
    %13 = vsyncpa [#allocation3], 0
    %14 = vsyncpa [#allocation6], 0
    %15 = vsyncpa [#allocation9], 0
    %16 = vsyncpa [#allocation12], 0
    %17 = vsyncpa [#allocation4], 0
    %18 = vsyncpa [#allocation15], 0
    // Predicated region
    $region2: #{tpu_custom_call.1} parent=1 // pred_check
      _
    $region3: #{tpu_custom_call.1} parent=1 // pred_check_branch
      %20 = sbr.rel (0) target = $region5
    $region4: #{tpu_custom_call.1} parent=1 // pred_region
      %s22 = ssub.s32 256, 256
      %23 = vsyncadd [#allocation3], %s22
      %s25 = sshll.u32 [#allocation2], 4
      %s26 = int_to_ptr.vmem [resolvable:$true] %s25
      %28 = dma.hbm_to_vmem [thread:$0]  %s0, 256, %s26, [#allocation3]
    $region5: #{tpu_custom_call.1} parent=1 // pred_fallthru
      _
    // Predicated region
    $region6: #{tpu_custom_call.1} parent=1 // pred_check
      _
    $region7: #{tpu_custom_call.1} parent=1 // pred_check_branch
      %30 = sbr.rel (0) target = $region9
    $region8: #{tpu_custom_call.1} parent=1 // pred_region
      %s32 = ssub.s32 256, 256
      %33 = vsyncadd [#allocation6], %s32
      %s35 = sshll.u32 [#allocation5], 4
      %s36 = int_to_ptr.vmem [resolvable:$true] %s35
      %38 = dma.hbm_to_vmem [thread:$0]  %s1, 256, %s36, [#allocation6]
    $region9: #{tpu_custom_call.1} parent=1 // pred_fallthru
      _
    // Predicated region
    $region10: #{tpu_custom_call.1} parent=1 // pred_check
      _
    $region11: #{tpu_custom_call.1} parent=1 // pred_check_branch
      %40 = sbr.rel (0) target = $region13
    $region12: #{tpu_custom_call.1} parent=1 // pred_region
      %s42 = ssub.s32 256, 256
      %43 = vsyncadd [#allocation6], %s42
      %s45 = sshll.u32 [#allocation7], 4
      %s46 = int_to_ptr.vmem [resolvable:$true] %s45
      %48 = dma.hbm_to_vmem [thread:$0]  %s2, 256, %s46, [#allocation6]
    $region13: #{tpu_custom_call.1} parent=1 // pred_fallthru
      _
    // Predicated region
    $region14: #{tpu_custom_call.1} parent=1 // pred_check
      _
    $region15: #{tpu_custom_call.1} parent=1 // pred_check_branch
      %50 = sbr.rel (0) target = $region17
    $region16: #{tpu_custom_call.1} parent=1 // pred_region
      %s52 = ssub.s32 49152, 49152
      %53 = vsyncadd [#allocation9], %s52
      %s54 = sshll.u32 [#allocation8], 4
      %s55 = int_to_ptr.vmem [resolvable:$true] %s54
      %60 = dma.hbm_to_vmem [thread:$0]  %s3, 49152, %s55, [#allocation9], 512, 512, 32
    $region17: #{tpu_custom_call.1} parent=1 // pred_fallthru
      _
    // Predicated region
    $region18: #{tpu_custom_call.1} parent=1 // pred_check
      _
    $region19: #{tpu_custom_call.1} parent=1 // pred_check_branch
      %62 = sbr.rel (0) target = $region21
    $region20: #{tpu_custom_call.1} parent=1 // pred_region
      %s64 = ssub.s32 16384, 16384
      %65 = vsyncadd [#allocation9], %s64
      %s66 = sshll.u32 [#allocation10], 4
      %s67 = int_to_ptr.vmem [resolvable:$true] %s66
      %72 = dma.hbm_to_vmem [thread:$0]  %s4, 16384, %s67, [#allocation9], 256, 256, 16
    $region21: #{tpu_custom_call.1} parent=1 // pred_fallthru
      _
    // Predicated region
    $region22: #{tpu_custom_call.1} parent=1 // pred_check
      _
    $region23: #{tpu_custom_call.1} parent=1 // pred_check_branch
      %74 = sbr.rel (0) target = $region25
    $region24: #{tpu_custom_call.1} parent=1 // pred_region
      %s76 = ssub.s32 32, 32
      %77 = vsyncadd [#allocation12], %s76
      %s79 = sshll.u32 [#allocation11], 4
      %s80 = int_to_ptr.vmem [resolvable:$true] %s79
      %82 = dma.hbm_to_vmem [thread:$0]  %s5, 32, %s80, [#allocation12]
    $region25: #{tpu_custom_call.1} parent=1 // pred_fallthru
      _
    // Predicated region
    $region26: #{tpu_custom_call.1} parent=1 // pred_check
      _
    $region27: #{tpu_custom_call.1} parent=1 // pred_check_branch
      %84 = sbr.rel (0) target = $region29
    $region28: #{tpu_custom_call.1} parent=1 // pred_region
      %85 = dma.done [#allocation3], 256
    $region29: #{tpu_custom_call.1} parent=1 // pred_fallthru
      _
    // Predicated region
    $region30: #{tpu_custom_call.1} parent=1 // pred_check
      _
    $region31: #{tpu_custom_call.1} parent=1 // pred_check_branch
      %87 = sbr.rel (0) target = $region33
    $region32: #{tpu_custom_call.1} parent=1 // pred_region
      %88 = dma.done [#allocation6], 256
    $region33: #{tpu_custom_call.1} parent=1 // pred_fallthru
      _
    // Predicated region
    $region34: #{tpu_custom_call.1} parent=1 // pred_check
      _
    $region35: #{tpu_custom_call.1} parent=1 // pred_check_branch
      %90 = sbr.rel (0) target = $region37
    $region36: #{tpu_custom_call.1} parent=1 // pred_region
      %91 = dma.done [#allocation6], 256
    $region37: #{tpu_custom_call.1} parent=1 // pred_fallthru
      _
    // Predicated region
    $region38: #{tpu_custom_call.1} parent=1 // pred_check
      _
    $region39: #{tpu_custom_call.1} parent=1 // pred_check_branch
      %93 = sbr.rel (0) target = $region41
    $region40: #{tpu_custom_call.1} parent=1 // pred_region
      %94 = dma.done [#allocation9], 49152
    $region41: #{tpu_custom_call.1} parent=1 // pred_fallthru
      _
    // Predicated region
    $region42: #{tpu_custom_call.1} parent=1 // pred_check
      _
    $region43: #{tpu_custom_call.1} parent=1 // pred_check_branch
      %96 = sbr.rel (0) target = $region45
    $region44: #{tpu_custom_call.1} parent=1 // pred_region
      %97 = dma.done [#allocation9], 16384
    $region45: #{tpu_custom_call.1} parent=1 // pred_fallthru
      _
    // Predicated region
    $region46: #{tpu_custom_call.1} parent=1 // pred_check
      _
    $region47: #{tpu_custom_call.1} parent=1 // pred_check_branch
      %99 = sbr.rel (0) target = $region49
    $region48: #{tpu_custom_call.1} parent=1 // pred_region
      %100 = dma.done [#allocation12], 32
    $region49: #{tpu_custom_call.1} parent=1 // pred_fallthru
      _
    %v101 = vld [vmem:[#allocation2] sm:$0xff]
    %v102 = vld [vmem:[#allocation2 + $0x8] sm:$0xff]
    %v103 = vld [vmem:[#allocation8] sm:$0xff]
    %v104 = vld [vmem:[#allocation8 + $0x8] sm:$0xff]
    %v105 = vld [vmem:[#allocation8 + $0x10] sm:$0xff]
    %v106 = vld [vmem:[#allocation8 + $0x18] sm:$0xff]
    %v107 = vld [vmem:[#allocation8 + $0x20] sm:$0xff]
    %v108 = vld [vmem:[#allocation8 + $0x28] sm:$0xff]
    %v109 = vld [vmem:[#allocation8 + $0x30] sm:$0xff]
    %v110 = vld [vmem:[#allocation8 + $0x38] sm:$0xff]
    %v111 = vld [vmem:[#allocation8 + $0x40] sm:$0xff]
    %v112 = vld [vmem:[#allocation8 + $0x48] sm:$0xff]
    %v113 = vld [vmem:[#allocation8 + $0x50] sm:$0xff]
    %v114 = vld [vmem:[#allocation8 + $0x58] sm:$0xff]
    %v115 = vld [vmem:[#allocation8 + $0x60] sm:$0xff]
    %v116 = vld [vmem:[#allocation8 + $0x68] sm:$0xff]
    %v117 = vld [vmem:[#allocation8 + $0x70] sm:$0xff]
    %v118 = vld [vmem:[#allocation8 + $0x78] sm:$0xff]
    %v119 = vld [vmem:[#allocation8 + $0x80] sm:$0xff]
    %v120 = vld [vmem:[#allocation8 + $0x88] sm:$0xff]
    %v121 = vld [vmem:[#allocation8 + $0x90] sm:$0xff]
    %v122 = vld [vmem:[#allocation8 + $0x98] sm:$0xff]
    %v123 = vld [vmem:[#allocation8 + $0xa0] sm:$0xff]
    %v124 = vld [vmem:[#allocation8 + $0xa8] sm:$0xff]
    %v125 = vld [vmem:[#allocation8 + $0xb0] sm:$0xff]
    %v126 = vld [vmem:[#allocation8 + $0xb8] sm:$0xff]
    %v127 = vld [vmem:[#allocation8 + $0xc0] sm:$0xff]
    %v128 = vld [vmem:[#allocation8 + $0xc8] sm:$0xff]
    %v129 = vld [vmem:[#allocation8 + $0xd0] sm:$0xff]
    %v130 = vld [vmem:[#allocation8 + $0xd8] sm:$0xff]
    %v131 = vld [vmem:[#allocation8 + $0xe0] sm:$0xff]
    %v132 = vld [vmem:[#allocation8 + $0xe8] sm:$0xff]
    %v133 = vld [vmem:[#allocation8 + $0xf0] sm:$0xff]
    %v134 = vld [vmem:[#allocation8 + $0xf8] sm:$0xff]
    %v135 = vld [vmem:[#allocation8 + $0x100] sm:$0xff]
    %v136 = vld [vmem:[#allocation8 + $0x108] sm:$0xff]
    %v137 = vld [vmem:[#allocation8 + $0x110] sm:$0xff]
    %v138 = vld [vmem:[#allocation8 + $0x118] sm:$0xff]
    %v139 = vld [vmem:[#allocation8 + $0x120] sm:$0xff]
    %v140 = vld [vmem:[#allocation8 + $0x128] sm:$0xff]
    %v141 = vld [vmem:[#allocation8 + $0x130] sm:$0xff]
    %v142 = vld [vmem:[#allocation8 + $0x138] sm:$0xff]
    %v143 = vld [vmem:[#allocation8 + $0x140] sm:$0xff]
    %v144 = vld [vmem:[#allocation8 + $0x148] sm:$0xff]
    %v145 = vld [vmem:[#allocation8 + $0x150] sm:$0xff]
    %v146 = vld [vmem:[#allocation8 + $0x158] sm:$0xff]
    %v147 = vld [vmem:[#allocation8 + $0x160] sm:$0xff]
    %v148 = vld [vmem:[#allocation8 + $0x168] sm:$0xff]
    %v149 = vld [vmem:[#allocation8 + $0x170] sm:$0xff]
    %v150 = vld [vmem:[#allocation8 + $0x178] sm:$0xff]
    %v151 = vld [vmem:[#allocation8 + $0x180] sm:$0xff]
    %v152 = vld [vmem:[#allocation8 + $0x188] sm:$0xff]
    %v153 = vld [vmem:[#allocation8 + $0x190] sm:$0xff]
    %v154 = vld [vmem:[#allocation8 + $0x198] sm:$0xff]
    %v155 = vld [vmem:[#allocation8 + $0x1a0] sm:$0xff]
    %v156 = vld [vmem:[#allocation8 + $0x1a8] sm:$0xff]
    %v157 = vld [vmem:[#allocation8 + $0x1b0] sm:$0xff]
    %v158 = vld [vmem:[#allocation8 + $0x1b8] sm:$0xff]
    %v159 = vld [vmem:[#allocation8 + $0x1c0] sm:$0xff]
    %v160 = vld [vmem:[#allocation8 + $0x1c8] sm:$0xff]
    %v161 = vld [vmem:[#allocation8 + $0x1d0] sm:$0xff]
    %v162 = vld [vmem:[#allocation8 + $0x1d8] sm:$0xff]
    %v163 = vld [vmem:[#allocation8 + $0x1e0] sm:$0xff]
    %v164 = vld [vmem:[#allocation8 + $0x1e8] sm:$0xff]
    %v165 = vld [vmem:[#allocation8 + $0x1f0] sm:$0xff]
    %v166 = vld [vmem:[#allocation8 + $0x1f8] sm:$0xff]
    %v167 = vld [vmem:[#allocation8 + $0x200] sm:$0xff]
    %v168 = vld [vmem:[#allocation8 + $0x208] sm:$0xff]
    %v169 = vld [vmem:[#allocation8 + $0x210] sm:$0xff]
    %v170 = vld [vmem:[#allocation8 + $0x218] sm:$0xff]
    %v171 = vld [vmem:[#allocation8 + $0x220] sm:$0xff]
    %v172 = vld [vmem:[#allocation8 + $0x228] sm:$0xff]
    %v173 = vld [vmem:[#allocation8 + $0x230] sm:$0xff]
    %v174 = vld [vmem:[#allocation8 + $0x238] sm:$0xff]
    %v175 = vld [vmem:[#allocation8 + $0x240] sm:$0xff]
    %v176 = vld [vmem:[#allocation8 + $0x248] sm:$0xff]
    %v177 = vld [vmem:[#allocation8 + $0x250] sm:$0xff]
    %v178 = vld [vmem:[#allocation8 + $0x258] sm:$0xff]
    %v179 = vld [vmem:[#allocation8 + $0x260] sm:$0xff]
    %v180 = vld [vmem:[#allocation8 + $0x268] sm:$0xff]
    %v181 = vld [vmem:[#allocation8 + $0x270] sm:$0xff]
    %v182 = vld [vmem:[#allocation8 + $0x278] sm:$0xff]
    %v183 = vld [vmem:[#allocation8 + $0x280] sm:$0xff]
    %v184 = vld [vmem:[#allocation8 + $0x288] sm:$0xff]
    %v185 = vld [vmem:[#allocation8 + $0x290] sm:$0xff]
    %v186 = vld [vmem:[#allocation8 + $0x298] sm:$0xff]
    %v187 = vld [vmem:[#allocation8 + $0x2a0] sm:$0xff]
    %v188 = vld [vmem:[#allocation8 + $0x2a8] sm:$0xff]
    %v189 = vld [vmem:[#allocation8 + $0x2b0] sm:$0xff]
    %v190 = vld [vmem:[#allocation8 + $0x2b8] sm:$0xff]
    %v191 = vld [vmem:[#allocation8 + $0x2c0] sm:$0xff]
    %v192 = vld [vmem:[#allocation8 + $0x2c8] sm:$0xff]
    %v193 = vld [vmem:[#allocation8 + $0x2d0] sm:$0xff]
    %v194 = vld [vmem:[#allocation8 + $0x2d8] sm:$0xff]
    %v195 = vld [vmem:[#allocation8 + $0x2e0] sm:$0xff]
    %v196 = vld [vmem:[#allocation8 + $0x2e8] sm:$0xff]
    %v197 = vld [vmem:[#allocation8 + $0x2f0] sm:$0xff]
    %v198 = vld [vmem:[#allocation8 + $0x2f8] sm:$0xff]
    %v199 = vld [vmem:[#allocation8 + $0x300] sm:$0xff]
    %v200 = vld [vmem:[#allocation8 + $0x308] sm:$0xff]
    %v201 = vld [vmem:[#allocation8 + $0x310] sm:$0xff]
    %v202 = vld [vmem:[#allocation8 + $0x318] sm:$0xff]
    %v203 = vld [vmem:[#allocation8 + $0x320] sm:$0xff]
    %v204 = vld [vmem:[#allocation8 + $0x328] sm:$0xff]
    %v205 = vld [vmem:[#allocation8 + $0x330] sm:$0xff]
    %v206 = vld [vmem:[#allocation8 + $0x338] sm:$0xff]
    %v207 = vld [vmem:[#allocation8 + $0x340] sm:$0xff]
    %v208 = vld [vmem:[#allocation8 + $0x348] sm:$0xff]
    %v209 = vld [vmem:[#allocation8 + $0x350] sm:$0xff]
    %v210 = vld [vmem:[#allocation8 + $0x358] sm:$0xff]
    %v211 = vld [vmem:[#allocation8 + $0x360] sm:$0xff]
    %v212 = vld [vmem:[#allocation8 + $0x368] sm:$0xff]
    %v213 = vld [vmem:[#allocation8 + $0x370] sm:$0xff]
    %v214 = vld [vmem:[#allocation8 + $0x378] sm:$0xff]
    %v215 = vld [vmem:[#allocation8 + $0x380] sm:$0xff]
    %v216 = vld [vmem:[#allocation8 + $0x388] sm:$0xff]
    %v217 = vld [vmem:[#allocation8 + $0x390] sm:$0xff]
    %v218 = vld [vmem:[#allocation8 + $0x398] sm:$0xff]
    %v219 = vld [vmem:[#allocation8 + $0x3a0] sm:$0xff]
    %v220 = vld [vmem:[#allocation8 + $0x3a8] sm:$0xff]
    %v221 = vld [vmem:[#allocation8 + $0x3b0] sm:$0xff]
    %v222 = vld [vmem:[#allocation8 + $0x3b8] sm:$0xff]
    %v223 = vld [vmem:[#allocation8 + $0x3c0] sm:$0xff]
    %v224 = vld [vmem:[#allocation8 + $0x3c8] sm:$0xff]
    %v225 = vld [vmem:[#allocation8 + $0x3d0] sm:$0xff]
    %v226 = vld [vmem:[#allocation8 + $0x3d8] sm:$0xff]
    %v227 = vld [vmem:[#allocation8 + $0x3e0] sm:$0xff]
    %v228 = vld [vmem:[#allocation8 + $0x3e8] sm:$0xff]
    %v229 = vld [vmem:[#allocation8 + $0x3f0] sm:$0xff]
    %v230 = vld [vmem:[#allocation8 + $0x3f8] sm:$0xff]
    %v231 = vld [vmem:[#allocation5] sm:$0xff]
    %v232 = vld [vmem:[#allocation5 + $0x8] sm:$0xff]
    %s233 = scalar_lea.vmem [#allocation8], 1024
    %v234 = vld [vmem:[%s233] sm:$0xff]
    %v235 = vld [vmem:[%s233 + $0x8] sm:$0xff]
    %v236 = vld [vmem:[%s233 + $0x10] sm:$0xff]
    %v237 = vld [vmem:[%s233 + $0x18] sm:$0xff]
    %v238 = vld [vmem:[%s233 + $0x20] sm:$0xff]
    %v239 = vld [vmem:[%s233 + $0x28] sm:$0xff]
    %v240 = vld [vmem:[%s233 + $0x30] sm:$0xff]
    %v241 = vld [vmem:[%s233 + $0x38] sm:$0xff]
    %v242 = vld [vmem:[%s233 + $0x40] sm:$0xff]
    %v243 = vld [vmem:[%s233 + $0x48] sm:$0xff]
    %v244 = vld [vmem:[%s233 + $0x50] sm:$0xff]
    %v245 = vld [vmem:[%s233 + $0x58] sm:$0xff]
    %v246 = vld [vmem:[%s233 + $0x60] sm:$0xff]
    %v247 = vld [vmem:[%s233 + $0x68] sm:$0xff]
    %v248 = vld [vmem:[%s233 + $0x70] sm:$0xff]
    %v249 = vld [vmem:[%s233 + $0x78] sm:$0xff]
    %v250 = vld [vmem:[%s233 + $0x80] sm:$0xff]
    %v251 = vld [vmem:[%s233 + $0x88] sm:$0xff]
    %v252 = vld [vmem:[%s233 + $0x90] sm:$0xff]
    %v253 = vld [vmem:[%s233 + $0x98] sm:$0xff]
    %v254 = vld [vmem:[%s233 + $0xa0] sm:$0xff]
    %v255 = vld [vmem:[%s233 + $0xa8] sm:$0xff]
    %v256 = vld [vmem:[%s233 + $0xb0] sm:$0xff]
    %v257 = vld [vmem:[%s233 + $0xb8] sm:$0xff]
    %v258 = vld [vmem:[%s233 + $0xc0] sm:$0xff]
    %v259 = vld [vmem:[%s233 + $0xc8] sm:$0xff]
    %v260 = vld [vmem:[%s233 + $0xd0] sm:$0xff]
    %v261 = vld [vmem:[%s233 + $0xd8] sm:$0xff]
    %v262 = vld [vmem:[%s233 + $0xe0] sm:$0xff]
    %v263 = vld [vmem:[%s233 + $0xe8] sm:$0xff]
    %v264 = vld [vmem:[%s233 + $0xf0] sm:$0xff]
    %v265 = vld [vmem:[%s233 + $0xf8] sm:$0xff]
    %v266 = vld [vmem:[%s233 + $0x100] sm:$0xff]
    %v267 = vld [vmem:[%s233 + $0x108] sm:$0xff]
    %v268 = vld [vmem:[%s233 + $0x110] sm:$0xff]
    %v269 = vld [vmem:[%s233 + $0x118] sm:$0xff]
    %v270 = vld [vmem:[%s233 + $0x120] sm:$0xff]
    %v271 = vld [vmem:[%s233 + $0x128] sm:$0xff]
    %v272 = vld [vmem:[%s233 + $0x130] sm:$0xff]
    %v273 = vld [vmem:[%s233 + $0x138] sm:$0xff]
    %v274 = vld [vmem:[%s233 + $0x140] sm:$0xff]
    %v275 = vld [vmem:[%s233 + $0x148] sm:$0xff]
    %v276 = vld [vmem:[%s233 + $0x150] sm:$0xff]
    %v277 = vld [vmem:[%s233 + $0x158] sm:$0xff]
    %v278 = vld [vmem:[%s233 + $0x160] sm:$0xff]
    %v279 = vld [vmem:[%s233 + $0x168] sm:$0xff]
    %v280 = vld [vmem:[%s233 + $0x170] sm:$0xff]
    %v281 = vld [vmem:[%s233 + $0x178] sm:$0xff]
    %v282 = vld [vmem:[%s233 + $0x180] sm:$0xff]
    %v283 = vld [vmem:[%s233 + $0x188] sm:$0xff]
    %v284 = vld [vmem:[%s233 + $0x190] sm:$0xff]
    %v285 = vld [vmem:[%s233 + $0x198] sm:$0xff]
    %v286 = vld [vmem:[%s233 + $0x1a0] sm:$0xff]
    %v287 = vld [vmem:[%s233 + $0x1a8] sm:$0xff]
    %v288 = vld [vmem:[%s233 + $0x1b0] sm:$0xff]
    %v289 = vld [vmem:[%s233 + $0x1b8] sm:$0xff]
    %v290 = vld [vmem:[%s233 + $0x1c0] sm:$0xff]
    %v291 = vld [vmem:[%s233 + $0x1c8] sm:$0xff]
    %v292 = vld [vmem:[%s233 + $0x1d0] sm:$0xff]
    %v293 = vld [vmem:[%s233 + $0x1d8] sm:$0xff]
    %v294 = vld [vmem:[%s233 + $0x1e0] sm:$0xff]
    %v295 = vld [vmem:[%s233 + $0x1e8] sm:$0xff]
    %v296 = vld [vmem:[%s233 + $0x1f0] sm:$0xff]
    %v297 = vld [vmem:[%s233 + $0x1f8] sm:$0xff]
    %v298 = vld [vmem:[%s233 + $0x200] sm:$0xff]
    %v299 = vld [vmem:[%s233 + $0x208] sm:$0xff]
    %v300 = vld [vmem:[%s233 + $0x210] sm:$0xff]
    %v301 = vld [vmem:[%s233 + $0x218] sm:$0xff]
    %v302 = vld [vmem:[%s233 + $0x220] sm:$0xff]
    %v303 = vld [vmem:[%s233 + $0x228] sm:$0xff]
    %v304 = vld [vmem:[%s233 + $0x230] sm:$0xff]
    %v305 = vld [vmem:[%s233 + $0x238] sm:$0xff]
    %v306 = vld [vmem:[%s233 + $0x240] sm:$0xff]
    %v307 = vld [vmem:[%s233 + $0x248] sm:$0xff]
    %v308 = vld [vmem:[%s233 + $0x250] sm:$0xff]
    %v309 = vld [vmem:[%s233 + $0x258] sm:$0xff]
    %v310 = vld [vmem:[%s233 + $0x260] sm:$0xff]
    %v311 = vld [vmem:[%s233 + $0x268] sm:$0xff]
    %v312 = vld [vmem:[%s233 + $0x270] sm:$0xff]
    %v313 = vld [vmem:[%s233 + $0x278] sm:$0xff]
    %v314 = vld [vmem:[%s233 + $0x280] sm:$0xff]
    %v315 = vld [vmem:[%s233 + $0x288] sm:$0xff]
    %v316 = vld [vmem:[%s233 + $0x290] sm:$0xff]
    %v317 = vld [vmem:[%s233 + $0x298] sm:$0xff]
    %v318 = vld [vmem:[%s233 + $0x2a0] sm:$0xff]
    %v319 = vld [vmem:[%s233 + $0x2a8] sm:$0xff]
    %v320 = vld [vmem:[%s233 + $0x2b0] sm:$0xff]
    %v321 = vld [vmem:[%s233 + $0x2b8] sm:$0xff]
    %v322 = vld [vmem:[%s233 + $0x2c0] sm:$0xff]
    %v323 = vld [vmem:[%s233 + $0x2c8] sm:$0xff]
    %v324 = vld [vmem:[%s233 + $0x2d0] sm:$0xff]
    %v325 = vld [vmem:[%s233 + $0x2d8] sm:$0xff]
    %v326 = vld [vmem:[%s233 + $0x2e0] sm:$0xff]
    %v327 = vld [vmem:[%s233 + $0x2e8] sm:$0xff]
    %v328 = vld [vmem:[%s233 + $0x2f0] sm:$0xff]
    %v329 = vld [vmem:[%s233 + $0x2f8] sm:$0xff]
    %v330 = vld [vmem:[%s233 + $0x300] sm:$0xff]
    %v331 = vld [vmem:[%s233 + $0x308] sm:$0xff]
    %v332 = vld [vmem:[%s233 + $0x310] sm:$0xff]
    %v333 = vld [vmem:[%s233 + $0x318] sm:$0xff]
    %v334 = vld [vmem:[%s233 + $0x320] sm:$0xff]
    %v335 = vld [vmem:[%s233 + $0x328] sm:$0xff]
    %v336 = vld [vmem:[%s233 + $0x330] sm:$0xff]
    %v337 = vld [vmem:[%s233 + $0x338] sm:$0xff]
    %v338 = vld [vmem:[%s233 + $0x340] sm:$0xff]
    %v339 = vld [vmem:[%s233 + $0x348] sm:$0xff]
    %v340 = vld [vmem:[%s233 + $0x350] sm:$0xff]
    %v341 = vld [vmem:[%s233 + $0x358] sm:$0xff]
    %v342 = vld [vmem:[%s233 + $0x360] sm:$0xff]
    %v343 = vld [vmem:[%s233 + $0x368] sm:$0xff]
    %v344 = vld [vmem:[%s233 + $0x370] sm:$0xff]
    %v345 = vld [vmem:[%s233 + $0x378] sm:$0xff]
    %v346 = vld [vmem:[%s233 + $0x380] sm:$0xff]
    %v347 = vld [vmem:[%s233 + $0x388] sm:$0xff]
    %v348 = vld [vmem:[%s233 + $0x390] sm:$0xff]
    %v349 = vld [vmem:[%s233 + $0x398] sm:$0xff]
    %v350 = vld [vmem:[%s233 + $0x3a0] sm:$0xff]
    %v351 = vld [vmem:[%s233 + $0x3a8] sm:$0xff]
    %v352 = vld [vmem:[%s233 + $0x3b0] sm:$0xff]
    %v353 = vld [vmem:[%s233 + $0x3b8] sm:$0xff]
    %v354 = vld [vmem:[%s233 + $0x3c0] sm:$0xff]
    %v355 = vld [vmem:[%s233 + $0x3c8] sm:$0xff]
    %v356 = vld [vmem:[%s233 + $0x3d0] sm:$0xff]
    %v357 = vld [vmem:[%s233 + $0x3d8] sm:$0xff]
    %v358 = vld [vmem:[%s233 + $0x3e0] sm:$0xff]
    %v359 = vld [vmem:[%s233 + $0x3e8] sm:$0xff]
    %v360 = vld [vmem:[%s233 + $0x3f0] sm:$0xff]
    %v361 = vld [vmem:[%s233 + $0x3f8] sm:$0xff]
    %362 = vmatprep.subr.mxu0 %v235
    %363 = vmatpush1.msra.mxu0 %v234
    %364 = vmatprep.subr.mxu0 %v239
    %365 = vmatpush1.msra.mxu0 %v238
    %366 = vmatprep.subr.mxu0 %v243
    %367 = vmatpush1.msra.mxu0 %v242
    %368 = vmatprep.subr.mxu0 %v247
    %369 = vmatpush1.msra.mxu0 %v246
    %370 = vmatprep.subr.mxu0 %v251
    %371 = vmatpush1.msra.mxu0 %v250
    %372 = vmatprep.subr.mxu0 %v255
    %373 = vmatpush1.msra.mxu0 %v254
    %374 = vmatprep.subr.mxu0 %v259
    %375 = vmatpush1.msra.mxu0 %v258
    %376 = vmatprep.subr.mxu0 %v263
    %377 = vmatpush1.msra.mxu0 %v262
    %378 = vmatprep.subr.mxu0 %v267
    %379 = vmatpush1.msra.mxu0 %v266
    %380 = vmatprep.subr.mxu0 %v271
    %381 = vmatpush1.msra.mxu0 %v270
    %382 = vmatprep.subr.mxu0 %v275
    %383 = vmatpush1.msra.mxu0 %v274
    %384 = vmatprep.subr.mxu0 %v279
    %385 = vmatpush1.msra.mxu0 %v278
    %386 = vmatprep.subr.mxu0 %v283
    %387 = vmatpush1.msra.mxu0 %v282
    %388 = vmatprep.subr.mxu0 %v287
    %389 = vmatpush1.msra.mxu0 %v286
    %390 = vmatprep.subr.mxu0 %v291
    %391 = vmatpush1.msra.mxu0 %v290
    %392 = vmatprep.subr.mxu0 %v295
    %393 = vmatpush1.msra.mxu0 %v294
    %394 = vmatprep.subr.mxu0 %v299
    %395 = vmatpush1.msra.mxu0 %v298
    %396 = vmatprep.subr.mxu0 %v303
    %397 = vmatpush1.msra.mxu0 %v302
    %398 = vmatprep.subr.mxu0 %v307
    %399 = vmatpush1.msra.mxu0 %v306
    %400 = vmatprep.subr.mxu0 %v311
    %401 = vmatpush1.msra.mxu0 %v310
    %402 = vmatprep.subr.mxu0 %v315
    %403 = vmatpush1.msra.mxu0 %v314
    %404 = vmatprep.subr.mxu0 %v319
    %405 = vmatpush1.msra.mxu0 %v318
    %406 = vmatprep.subr.mxu0 %v323
    %407 = vmatpush1.msra.mxu0 %v322
    %408 = vmatprep.subr.mxu0 %v327
    %409 = vmatpush1.msra.mxu0 %v326
    %410 = vmatprep.subr.mxu0 %v331
    %411 = vmatpush1.msra.mxu0 %v330
    %412 = vmatprep.subr.mxu0 %v335
    %413 = vmatpush1.msra.mxu0 %v334
    %414 = vmatprep.subr.mxu0 %v339
    %415 = vmatpush1.msra.mxu0 %v338
    %416 = vmatprep.subr.mxu0 %v343
    %417 = vmatpush1.msra.mxu0 %v342
    %418 = vmatprep.subr.mxu0 %v347
    %419 = vmatpush1.msra.mxu0 %v346
    %420 = vmatprep.subr.mxu0 %v351
    %421 = vmatpush1.msra.mxu0 %v350
    %422 = vmatprep.subr.mxu0 %v355
    %423 = vmatpush1.msra.mxu0 %v354
    %424 = vmatprep.subr.mxu0 %v359
    %425 = vmatpush1.msra.mxu0 %v358
    %426 = vmatprep.mubr.f32.mxu0 %v232
    %427 = vmatmul.mubr.f32.gmra.mrb[0].mxu0 %v231
    %v428 = vpop.f32.mrb[0].mxu0
    %v429 = vadd.f32 0.0, %v428
    %v430 = vpop.f32.mrb[0].mxu0
    %v431 = vadd.f32 0.0, %v430
    %432 = vdwg.mxu0
    %433 = vmatprep.subr.mxu0 %v237
    %434 = vmatpush1.msra.mxu0 %v236
    %435 = vmatprep.subr.mxu0 %v241
    %436 = vmatpush1.msra.mxu0 %v240
    %437 = vmatprep.subr.mxu0 %v245
    %438 = vmatpush1.msra.mxu0 %v244
    %439 = vmatprep.subr.mxu0 %v249
    %440 = vmatpush1.msra.mxu0 %v248
    %441 = vmatprep.subr.mxu0 %v253
    %442 = vmatpush1.msra.mxu0 %v252
    %443 = vmatprep.subr.mxu0 %v257
    %444 = vmatpush1.msra.mxu0 %v256
    %445 = vmatprep.subr.mxu0 %v261
    %446 = vmatpush1.msra.mxu0 %v260
    %447 = vmatprep.subr.mxu0 %v265
    %448 = vmatpush1.msra.mxu0 %v264
    %449 = vmatprep.subr.mxu0 %v269
    %450 = vmatpush1.msra.mxu0 %v268
    %451 = vmatprep.subr.mxu0 %v273
    %452 = vmatpush1.msra.mxu0 %v272
    %453 = vmatprep.subr.mxu0 %v277
    %454 = vmatpush1.msra.mxu0 %v276
    %455 = vmatprep.subr.mxu0 %v281
    %456 = vmatpush1.msra.mxu0 %v280
    %457 = vmatprep.subr.mxu0 %v285
    %458 = vmatpush1.msra.mxu0 %v284
    %459 = vmatprep.subr.mxu0 %v289
    %460 = vmatpush1.msra.mxu0 %v288
    %461 = vmatprep.subr.mxu0 %v293
    %462 = vmatpush1.msra.mxu0 %v292
    %463 = vmatprep.subr.mxu0 %v297
    %464 = vmatpush1.msra.mxu0 %v296
    %465 = vmatprep.subr.mxu0 %v301
    %466 = vmatpush1.msra.mxu0 %v300
    %467 = vmatprep.subr.mxu0 %v305
    %468 = vmatpush1.msra.mxu0 %v304
    %469 = vmatprep.subr.mxu0 %v309
    %470 = vmatpush1.msra.mxu0 %v308
    %471 = vmatprep.subr.mxu0 %v313
    %472 = vmatpush1.msra.mxu0 %v312
    %473 = vmatprep.subr.mxu0 %v317
    %474 = vmatpush1.msra.mxu0 %v316
    %475 = vmatprep.subr.mxu0 %v321
    %476 = vmatpush1.msra.mxu0 %v320
    %477 = vmatprep.subr.mxu0 %v325
    %478 = vmatpush1.msra.mxu0 %v324
    %479 = vmatprep.subr.mxu0 %v329
    %480 = vmatpush1.msra.mxu0 %v328
    %481 = vmatprep.subr.mxu0 %v333
    %482 = vmatpush1.msra.mxu0 %v332
    %483 = vmatprep.subr.mxu0 %v337
    %484 = vmatpush1.msra.mxu0 %v336
    %485 = vmatprep.subr.mxu0 %v341
    %486 = vmatpush1.msra.mxu0 %v340
    %487 = vmatprep.subr.mxu0 %v345
    %488 = vmatpush1.msra.mxu0 %v344
    %489 = vmatprep.subr.mxu0 %v349
    %490 = vmatpush1.msra.mxu0 %v348
    %491 = vmatprep.subr.mxu0 %v353
    %492 = vmatpush1.msra.mxu0 %v352
    %493 = vmatprep.subr.mxu0 %v357
    %494 = vmatpush1.msra.mxu0 %v356
    %495 = vmatprep.subr.mxu0 %v361
    %496 = vmatpush1.msra.mxu0 %v360
    %497 = vmatprep.mubr.f32.mxu0 %v232
    %498 = vmatmul.mubr.f32.gmra.mrb[0].mxu0 %v231
    %v499 = vpop.f32.mrb[0].mxu0
    %v500 = vadd.f32 0.0, %v499
    %v501 = vpop.f32.mrb[0].mxu0
    %v502 = vadd.f32 0.0, %v501
    %503 = vdwg.mxu0
    %504 = vmatprep.subr.mxu0 %v104
    %505 = vmatpush1.msra.mxu0 %v103
    %506 = vmatprep.subr.mxu0 %v108
    %507 = vmatpush1.msra.mxu0 %v107
    %508 = vmatprep.subr.mxu0 %v112
    %509 = vmatpush1.msra.mxu0 %v111
    %510 = vmatprep.subr.mxu0 %v116
    %511 = vmatpush1.msra.mxu0 %v115
    %512 = vmatprep.subr.mxu0 %v120
    %513 = vmatpush1.msra.mxu0 %v119
    %514 = vmatprep.subr.mxu0 %v124
    %515 = vmatpush1.msra.mxu0 %v123
    %516 = vmatprep.subr.mxu0 %v128
    %517 = vmatpush1.msra.mxu0 %v127
    %518 = vmatprep.subr.mxu0 %v132
    %519 = vmatpush1.msra.mxu0 %v131
    %520 = vmatprep.subr.mxu0 %v136
    %521 = vmatpush1.msra.mxu0 %v135
    %522 = vmatprep.subr.mxu0 %v140
    %523 = vmatpush1.msra.mxu0 %v139
    %524 = vmatprep.subr.mxu0 %v144
    %525 = vmatpush1.msra.mxu0 %v143
    %526 = vmatprep.subr.mxu0 %v148
    %527 = vmatpush1.msra.mxu0 %v147
    %528 = vmatprep.subr.mxu0 %v152
    %529 = vmatpush1.msra.mxu0 %v151
    %530 = vmatprep.subr.mxu0 %v156
    %531 = vmatpush1.msra.mxu0 %v155
    %532 = vmatprep.subr.mxu0 %v160
    %533 = vmatpush1.msra.mxu0 %v159
    %534 = vmatprep.subr.mxu0 %v164
    %535 = vmatpush1.msra.mxu0 %v163
    %536 = vmatprep.subr.mxu0 %v168
    %537 = vmatpush1.msra.mxu0 %v167
    %538 = vmatprep.subr.mxu0 %v172
    %539 = vmatpush1.msra.mxu0 %v171
    %540 = vmatprep.subr.mxu0 %v176
    %541 = vmatpush1.msra.mxu0 %v175
    %542 = vmatprep.subr.mxu0 %v180
    %543 = vmatpush1.msra.mxu0 %v179
    %544 = vmatprep.subr.mxu0 %v184
    %545 = vmatpush1.msra.mxu0 %v183
    %546 = vmatprep.subr.mxu0 %v188
    %547 = vmatpush1.msra.mxu0 %v187
    %548 = vmatprep.subr.mxu0 %v192
    %549 = vmatpush1.msra.mxu0 %v191
    %550 = vmatprep.subr.mxu0 %v196
    %551 = vmatpush1.msra.mxu0 %v195
    %552 = vmatprep.subr.mxu0 %v200
    %553 = vmatpush1.msra.mxu0 %v199
    %554 = vmatprep.subr.mxu0 %v204
    %555 = vmatpush1.msra.mxu0 %v203
    %556 = vmatprep.subr.mxu0 %v208
    %557 = vmatpush1.msra.mxu0 %v207
    %558 = vmatprep.subr.mxu0 %v212
    %559 = vmatpush1.msra.mxu0 %v211
    %560 = vmatprep.subr.mxu0 %v216
    %561 = vmatpush1.msra.mxu0 %v215
    %562 = vmatprep.subr.mxu0 %v220
    %563 = vmatpush1.msra.mxu0 %v219
    %564 = vmatprep.subr.mxu0 %v224
    %565 = vmatpush1.msra.mxu0 %v223
    %566 = vmatprep.subr.mxu0 %v228
    %567 = vmatpush1.msra.mxu0 %v227
    %568 = vmatprep.mubr.f32.mxu0 %v102
    %569 = vmatmul.mubr.f32.gmra.mrb[0].mxu0 %v101
    %v570 = vpop.f32.mrb[0].mxu0
    %v571 = vadd.f32 %v429, %v570
    %v572 = vpop.f32.mrb[0].mxu0
    %v573 = vadd.f32 %v431, %v572
    %574 = vdwg.mxu0
    %575 = vmatprep.subr.mxu0 %v106
    %576 = vmatpush1.msra.mxu0 %v105
    %577 = vmatprep.subr.mxu0 %v110
    %578 = vmatpush1.msra.mxu0 %v109
    %579 = vmatprep.subr.mxu0 %v114
    %580 = vmatpush1.msra.mxu0 %v113
    %581 = vmatprep.subr.mxu0 %v118
    %582 = vmatpush1.msra.mxu0 %v117
    %583 = vmatprep.subr.mxu0 %v122
    %584 = vmatpush1.msra.mxu0 %v121
    %585 = vmatprep.subr.mxu0 %v126
    %586 = vmatpush1.msra.mxu0 %v125
    %587 = vmatprep.subr.mxu0 %v130
    %588 = vmatpush1.msra.mxu0 %v129
    %589 = vmatprep.subr.mxu0 %v134
    %590 = vmatpush1.msra.mxu0 %v133
    %591 = vmatprep.subr.mxu0 %v138
    %592 = vmatpush1.msra.mxu0 %v137
    %593 = vmatprep.subr.mxu0 %v142
    %594 = vmatpush1.msra.mxu0 %v141
    %595 = vmatprep.subr.mxu0 %v146
    %596 = vmatpush1.msra.mxu0 %v145
    %597 = vmatprep.subr.mxu0 %v150
    %598 = vmatpush1.msra.mxu0 %v149
    %599 = vmatprep.subr.mxu0 %v154
    %600 = vmatpush1.msra.mxu0 %v153
    %601 = vmatprep.subr.mxu0 %v158
    %602 = vmatpush1.msra.mxu0 %v157
    %603 = vmatprep.subr.mxu0 %v162
    %604 = vmatpush1.msra.mxu0 %v161
    %605 = vmatprep.subr.mxu0 %v166
    %606 = vmatpush1.msra.mxu0 %v165
    %607 = vmatprep.subr.mxu0 %v170
    %608 = vmatpush1.msra.mxu0 %v169
    %609 = vmatprep.subr.mxu0 %v174
    %610 = vmatpush1.msra.mxu0 %v173
    %611 = vmatprep.subr.mxu0 %v178
    %612 = vmatpush1.msra.mxu0 %v177
    %613 = vmatprep.subr.mxu0 %v182
    %614 = vmatpush1.msra.mxu0 %v181
    %615 = vmatprep.subr.mxu0 %v186
    %616 = vmatpush1.msra.mxu0 %v185
    %617 = vmatprep.subr.mxu0 %v190
    %618 = vmatpush1.msra.mxu0 %v189
    %619 = vmatprep.subr.mxu0 %v194
    %620 = vmatpush1.msra.mxu0 %v193
    %621 = vmatprep.subr.mxu0 %v198
    %622 = vmatpush1.msra.mxu0 %v197
    %623 = vmatprep.subr.mxu0 %v202
    %624 = vmatpush1.msra.mxu0 %v201
    %625 = vmatprep.subr.mxu0 %v206
    %626 = vmatpush1.msra.mxu0 %v205
    %627 = vmatprep.subr.mxu0 %v210
    %628 = vmatpush1.msra.mxu0 %v209
    %629 = vmatprep.subr.mxu0 %v214
    %630 = vmatpush1.msra.mxu0 %v213
    %631 = vmatprep.subr.mxu0 %v218
    %632 = vmatpush1.msra.mxu0 %v217
    %633 = vmatprep.subr.mxu0 %v222
    %634 = vmatpush1.msra.mxu0 %v221
    %635 = vmatprep.subr.mxu0 %v226
    %636 = vmatpush1.msra.mxu0 %v225
    %637 = vmatprep.subr.mxu0 %v230
    %638 = vmatpush1.msra.mxu0 %v229
    %639 = vmatprep.mubr.f32.mxu0 %v102
    %640 = vmatmul.mubr.f32.gmra.mrb[0].mxu0 %v101
    %v641 = vpop.f32.mrb[0].mxu0
    %v642 = vadd.f32 %v500, %v641
    %v643 = vpop.f32.mrb[0].mxu0
    %v644 = vadd.f32 %v502, %v643
    %645 = vdwg.mxu0
    %v646 = vld [vmem:[#allocation7] sm:$0xff]
    %v647 = vld [vmem:[#allocation7 + $0x8] sm:$0xff]
    %s648 = scalar_lea.vmem [#allocation8], 2048
    %v649 = vld [vmem:[%s648] sm:$0xff]
    %v650 = vld [vmem:[%s648 + $0x8] sm:$0xff]
    %v651 = vld [vmem:[%s648 + $0x10] sm:$0xff]
    %v652 = vld [vmem:[%s648 + $0x18] sm:$0xff]
    %v653 = vld [vmem:[%s648 + $0x20] sm:$0xff]
    %v654 = vld [vmem:[%s648 + $0x28] sm:$0xff]
    %v655 = vld [vmem:[%s648 + $0x30] sm:$0xff]
    %v656 = vld [vmem:[%s648 + $0x38] sm:$0xff]
    %v657 = vld [vmem:[%s648 + $0x40] sm:$0xff]
    %v658 = vld [vmem:[%s648 + $0x48] sm:$0xff]
    %v659 = vld [vmem:[%s648 + $0x50] sm:$0xff]
    %v660 = vld [vmem:[%s648 + $0x58] sm:$0xff]
    %v661 = vld [vmem:[%s648 + $0x60] sm:$0xff]
    %v662 = vld [vmem:[%s648 + $0x68] sm:$0xff]
    %v663 = vld [vmem:[%s648 + $0x70] sm:$0xff]
    %v664 = vld [vmem:[%s648 + $0x78] sm:$0xff]
    %v665 = vld [vmem:[%s648 + $0x80] sm:$0xff]
    %v666 = vld [vmem:[%s648 + $0x88] sm:$0xff]
    %v667 = vld [vmem:[%s648 + $0x90] sm:$0xff]
    %v668 = vld [vmem:[%s648 + $0x98] sm:$0xff]
    %v669 = vld [vmem:[%s648 + $0xa0] sm:$0xff]
    %v670 = vld [vmem:[%s648 + $0xa8] sm:$0xff]
    %v671 = vld [vmem:[%s648 + $0xb0] sm:$0xff]
    %v672 = vld [vmem:[%s648 + $0xb8] sm:$0xff]
    %v673 = vld [vmem:[%s648 + $0xc0] sm:$0xff]
    %v674 = vld [vmem:[%s648 + $0xc8] sm:$0xff]
    %v675 = vld [vmem:[%s648 + $0xd0] sm:$0xff]
    %v676 = vld [vmem:[%s648 + $0xd8] sm:$0xff]
    %v677 = vld [vmem:[%s648 + $0xe0] sm:$0xff]
    %v678 = vld [vmem:[%s648 + $0xe8] sm:$0xff]
    %v679 = vld [vmem:[%s648 + $0xf0] sm:$0xff]
    %v680 = vld [vmem:[%s648 + $0xf8] sm:$0xff]
    %v681 = vld [vmem:[%s648 + $0x100] sm:$0xff]
    %v682 = vld [vmem:[%s648 + $0x108] sm:$0xff]
    %v683 = vld [vmem:[%s648 + $0x110] sm:$0xff]
    %v684 = vld [vmem:[%s648 + $0x118] sm:$0xff]
    %v685 = vld [vmem:[%s648 + $0x120] sm:$0xff]
    %v686 = vld [vmem:[%s648 + $0x128] sm:$0xff]
    %v687 = vld [vmem:[%s648 + $0x130] sm:$0xff]
    %v688 = vld [vmem:[%s648 + $0x138] sm:$0xff]
    %v689 = vld [vmem:[%s648 + $0x140] sm:$0xff]
    %v690 = vld [vmem:[%s648 + $0x148] sm:$0xff]
    %v691 = vld [vmem:[%s648 + $0x150] sm:$0xff]
    %v692 = vld [vmem:[%s648 + $0x158] sm:$0xff]
    %v693 = vld [vmem:[%s648 + $0x160] sm:$0xff]
    %v694 = vld [vmem:[%s648 + $0x168] sm:$0xff]
    %v695 = vld [vmem:[%s648 + $0x170] sm:$0xff]
    %v696 = vld [vmem:[%s648 + $0x178] sm:$0xff]
    %v697 = vld [vmem:[%s648 + $0x180] sm:$0xff]
    %v698 = vld [vmem:[%s648 + $0x188] sm:$0xff]
    %v699 = vld [vmem:[%s648 + $0x190] sm:$0xff]
    %v700 = vld [vmem:[%s648 + $0x198] sm:$0xff]
    %v701 = vld [vmem:[%s648 + $0x1a0] sm:$0xff]
    %v702 = vld [vmem:[%s648 + $0x1a8] sm:$0xff]
    %v703 = vld [vmem:[%s648 + $0x1b0] sm:$0xff]
    %v704 = vld [vmem:[%s648 + $0x1b8] sm:$0xff]
    %v705 = vld [vmem:[%s648 + $0x1c0] sm:$0xff]
    %v706 = vld [vmem:[%s648 + $0x1c8] sm:$0xff]
    %v707 = vld [vmem:[%s648 + $0x1d0] sm:$0xff]
    %v708 = vld [vmem:[%s648 + $0x1d8] sm:$0xff]
    %v709 = vld [vmem:[%s648 + $0x1e0] sm:$0xff]
    %v710 = vld [vmem:[%s648 + $0x1e8] sm:$0xff]
    %v711 = vld [vmem:[%s648 + $0x1f0] sm:$0xff]
    %v712 = vld [vmem:[%s648 + $0x1f8] sm:$0xff]
    %v713 = vld [vmem:[%s648 + $0x200] sm:$0xff]
    %v714 = vld [vmem:[%s648 + $0x208] sm:$0xff]
    %v715 = vld [vmem:[%s648 + $0x210] sm:$0xff]
    %v716 = vld [vmem:[%s648 + $0x218] sm:$0xff]
    %v717 = vld [vmem:[%s648 + $0x220] sm:$0xff]
    %v718 = vld [vmem:[%s648 + $0x228] sm:$0xff]
    %v719 = vld [vmem:[%s648 + $0x230] sm:$0xff]
    %v720 = vld [vmem:[%s648 + $0x238] sm:$0xff]
    %v721 = vld [vmem:[%s648 + $0x240] sm:$0xff]
    %v722 = vld [vmem:[%s648 + $0x248] sm:$0xff]
    %v723 = vld [vmem:[%s648 + $0x250] sm:$0xff]
    %v724 = vld [vmem:[%s648 + $0x258] sm:$0xff]
    %v725 = vld [vmem:[%s648 + $0x260] sm:$0xff]
    %v726 = vld [vmem:[%s648 + $0x268] sm:$0xff]
    %v727 = vld [vmem:[%s648 + $0x270] sm:$0xff]
    %v728 = vld [vmem:[%s648 + $0x278] sm:$0xff]
    %v729 = vld [vmem:[%s648 + $0x280] sm:$0xff]
    %v730 = vld [vmem:[%s648 + $0x288] sm:$0xff]
    %v731 = vld [vmem:[%s648 + $0x290] sm:$0xff]
    %v732 = vld [vmem:[%s648 + $0x298] sm:$0xff]
    %v733 = vld [vmem:[%s648 + $0x2a0] sm:$0xff]
    %v734 = vld [vmem:[%s648 + $0x2a8] sm:$0xff]
    %v735 = vld [vmem:[%s648 + $0x2b0] sm:$0xff]
    %v736 = vld [vmem:[%s648 + $0x2b8] sm:$0xff]
    %v737 = vld [vmem:[%s648 + $0x2c0] sm:$0xff]
    %v738 = vld [vmem:[%s648 + $0x2c8] sm:$0xff]
    %v739 = vld [vmem:[%s648 + $0x2d0] sm:$0xff]
    %v740 = vld [vmem:[%s648 + $0x2d8] sm:$0xff]
    %v741 = vld [vmem:[%s648 + $0x2e0] sm:$0xff]
    %v742 = vld [vmem:[%s648 + $0x2e8] sm:$0xff]
    %v743 = vld [vmem:[%s648 + $0x2f0] sm:$0xff]
    %v744 = vld [vmem:[%s648 + $0x2f8] sm:$0xff]
    %v745 = vld [vmem:[%s648 + $0x300] sm:$0xff]
    %v746 = vld [vmem:[%s648 + $0x308] sm:$0xff]
    %v747 = vld [vmem:[%s648 + $0x310] sm:$0xff]
    %v748 = vld [vmem:[%s648 + $0x318] sm:$0xff]
    %v749 = vld [vmem:[%s648 + $0x320] sm:$0xff]
    %v750 = vld [vmem:[%s648 + $0x328] sm:$0xff]
    %v751 = vld [vmem:[%s648 + $0x330] sm:$0xff]
    %v752 = vld [vmem:[%s648 + $0x338] sm:$0xff]
    %v753 = vld [vmem:[%s648 + $0x340] sm:$0xff]
    %v754 = vld [vmem:[%s648 + $0x348] sm:$0xff]
    %v755 = vld [vmem:[%s648 + $0x350] sm:$0xff]
    %v756 = vld [vmem:[%s648 + $0x358] sm:$0xff]
    %v757 = vld [vmem:[%s648 + $0x360] sm:$0xff]
    %v758 = vld [vmem:[%s648 + $0x368] sm:$0xff]
    %v759 = vld [vmem:[%s648 + $0x370] sm:$0xff]
    %v760 = vld [vmem:[%s648 + $0x378] sm:$0xff]
    %v761 = vld [vmem:[%s648 + $0x380] sm:$0xff]
    %v762 = vld [vmem:[%s648 + $0x388] sm:$0xff]
    %v763 = vld [vmem:[%s648 + $0x390] sm:$0xff]
    %v764 = vld [vmem:[%s648 + $0x398] sm:$0xff]
    %v765 = vld [vmem:[%s648 + $0x3a0] sm:$0xff]
    %v766 = vld [vmem:[%s648 + $0x3a8] sm:$0xff]
    %v767 = vld [vmem:[%s648 + $0x3b0] sm:$0xff]
    %v768 = vld [vmem:[%s648 + $0x3b8] sm:$0xff]
    %v769 = vld [vmem:[%s648 + $0x3c0] sm:$0xff]
    %v770 = vld [vmem:[%s648 + $0x3c8] sm:$0xff]
    %v771 = vld [vmem:[%s648 + $0x3d0] sm:$0xff]
    %v772 = vld [vmem:[%s648 + $0x3d8] sm:$0xff]
    %v773 = vld [vmem:[%s648 + $0x3e0] sm:$0xff]
    %v774 = vld [vmem:[%s648 + $0x3e8] sm:$0xff]
    %v775 = vld [vmem:[%s648 + $0x3f0] sm:$0xff]
    %v776 = vld [vmem:[%s648 + $0x3f8] sm:$0xff]
    %777 = vmatprep.subr.mxu0 %v650
    %778 = vmatpush1.msra.mxu0 %v649
    %779 = vmatprep.subr.mxu0 %v654
    %780 = vmatpush1.msra.mxu0 %v653
    %781 = vmatprep.subr.mxu0 %v658
    %782 = vmatpush1.msra.mxu0 %v657
    %783 = vmatprep.subr.mxu0 %v662
    %784 = vmatpush1.msra.mxu0 %v661
    %785 = vmatprep.subr.mxu0 %v666
    %786 = vmatpush1.msra.mxu0 %v665
    %787 = vmatprep.subr.mxu0 %v670
    %788 = vmatpush1.msra.mxu0 %v669
    %789 = vmatprep.subr.mxu0 %v674
    %790 = vmatpush1.msra.mxu0 %v673
    %791 = vmatprep.subr.mxu0 %v678
    %792 = vmatpush1.msra.mxu0 %v677
    %793 = vmatprep.subr.mxu0 %v682
    %794 = vmatpush1.msra.mxu0 %v681
    %795 = vmatprep.subr.mxu0 %v686
    %796 = vmatpush1.msra.mxu0 %v685
    %797 = vmatprep.subr.mxu0 %v690
    %798 = vmatpush1.msra.mxu0 %v689
    %799 = vmatprep.subr.mxu0 %v694
    %800 = vmatpush1.msra.mxu0 %v693
    %801 = vmatprep.subr.mxu0 %v698
    %802 = vmatpush1.msra.mxu0 %v697
    %803 = vmatprep.subr.mxu0 %v702
    %804 = vmatpush1.msra.mxu0 %v701
    %805 = vmatprep.subr.mxu0 %v706
    %806 = vmatpush1.msra.mxu0 %v705
    %807 = vmatprep.subr.mxu0 %v710
    %808 = vmatpush1.msra.mxu0 %v709
    %809 = vmatprep.subr.mxu0 %v714
    %810 = vmatpush1.msra.mxu0 %v713
    %811 = vmatprep.subr.mxu0 %v718
    %812 = vmatpush1.msra.mxu0 %v717
    %813 = vmatprep.subr.mxu0 %v722
    %814 = vmatpush1.msra.mxu0 %v721
    %815 = vmatprep.subr.mxu0 %v726
    %816 = vmatpush1.msra.mxu0 %v725
    %817 = vmatprep.subr.mxu0 %v730
    %818 = vmatpush1.msra.mxu0 %v729
    %819 = vmatprep.subr.mxu0 %v734
    %820 = vmatpush1.msra.mxu0 %v733
    %821 = vmatprep.subr.mxu0 %v738
    %822 = vmatpush1.msra.mxu0 %v737
    %823 = vmatprep.subr.mxu0 %v742
    %824 = vmatpush1.msra.mxu0 %v741
    %825 = vmatprep.subr.mxu0 %v746
    %826 = vmatpush1.msra.mxu0 %v745
    %827 = vmatprep.subr.mxu0 %v750
    %828 = vmatpush1.msra.mxu0 %v749
    %829 = vmatprep.subr.mxu0 %v754
    %830 = vmatpush1.msra.mxu0 %v753
    %831 = vmatprep.subr.mxu0 %v758
    %832 = vmatpush1.msra.mxu0 %v757
    %833 = vmatprep.subr.mxu0 %v762
    %834 = vmatpush1.msra.mxu0 %v761
    %835 = vmatprep.subr.mxu0 %v766
    %836 = vmatpush1.msra.mxu0 %v765
    %837 = vmatprep.subr.mxu0 %v770
    %838 = vmatpush1.msra.mxu0 %v769
    %839 = vmatprep.subr.mxu0 %v774
    %840 = vmatpush1.msra.mxu0 %v773
    %841 = vmatprep.mubr.f32.mxu0 %v647
    %842 = vmatmul.mubr.f32.gmra.mrb[0].mxu0 %v646
    %v843 = vpop.f32.mrb[0].mxu0
    %v844 = vadd.f32 0.0, %v843
    %v845 = vpop.f32.mrb[0].mxu0
    %v846 = vadd.f32 0.0, %v845
    %847 = vdwg.mxu0
    %848 = vmatprep.subr.mxu0 %v652
    %849 = vmatpush1.msra.mxu0 %v651
    %850 = vmatprep.subr.mxu0 %v656
    %851 = vmatpush1.msra.mxu0 %v655
    %852 = vmatprep.subr.mxu0 %v660
    %853 = vmatpush1.msra.mxu0 %v659
    %854 = vmatprep.subr.mxu0 %v664
    %855 = vmatpush1.msra.mxu0 %v663
    %856 = vmatprep.subr.mxu0 %v668
    %857 = vmatpush1.msra.mxu0 %v667
    %858 = vmatprep.subr.mxu0 %v672
    %859 = vmatpush1.msra.mxu0 %v671
    %860 = vmatprep.subr.mxu0 %v676
    %861 = vmatpush1.msra.mxu0 %v675
    %862 = vmatprep.subr.mxu0 %v680
    %863 = vmatpush1.msra.mxu0 %v679
    %864 = vmatprep.subr.mxu0 %v684
    %865 = vmatpush1.msra.mxu0 %v683
    %866 = vmatprep.subr.mxu0 %v688
    %867 = vmatpush1.msra.mxu0 %v687
    %868 = vmatprep.subr.mxu0 %v692
    %869 = vmatpush1.msra.mxu0 %v691
    %870 = vmatprep.subr.mxu0 %v696
    %871 = vmatpush1.msra.mxu0 %v695
    %872 = vmatprep.subr.mxu0 %v700
    %873 = vmatpush1.msra.mxu0 %v699
    %874 = vmatprep.subr.mxu0 %v704
    %875 = vmatpush1.msra.mxu0 %v703
    %876 = vmatprep.subr.mxu0 %v708
    %877 = vmatpush1.msra.mxu0 %v707
    %878 = vmatprep.subr.mxu0 %v712
    %879 = vmatpush1.msra.mxu0 %v711
    %880 = vmatprep.subr.mxu0 %v716
    %881 = vmatpush1.msra.mxu0 %v715
    %882 = vmatprep.subr.mxu0 %v720
    %883 = vmatpush1.msra.mxu0 %v719
    %884 = vmatprep.subr.mxu0 %v724
    %885 = vmatpush1.msra.mxu0 %v723
    %886 = vmatprep.subr.mxu0 %v728
    %887 = vmatpush1.msra.mxu0 %v727
    %888 = vmatprep.subr.mxu0 %v732
    %889 = vmatpush1.msra.mxu0 %v731
    %890 = vmatprep.subr.mxu0 %v736
    %891 = vmatpush1.msra.mxu0 %v735
    %892 = vmatprep.subr.mxu0 %v740
    %893 = vmatpush1.msra.mxu0 %v739
    %894 = vmatprep.subr.mxu0 %v744
    %895 = vmatpush1.msra.mxu0 %v743
    %896 = vmatprep.subr.mxu0 %v748
    %897 = vmatpush1.msra.mxu0 %v747
    %898 = vmatprep.subr.mxu0 %v752
    %899 = vmatpush1.msra.mxu0 %v751
    %900 = vmatprep.subr.mxu0 %v756
    %901 = vmatpush1.msra.mxu0 %v755
    %902 = vmatprep.subr.mxu0 %v760
    %903 = vmatpush1.msra.mxu0 %v759
    %904 = vmatprep.subr.mxu0 %v764
    %905 = vmatpush1.msra.mxu0 %v763
    %906 = vmatprep.subr.mxu0 %v768
    %907 = vmatpush1.msra.mxu0 %v767
    %908 = vmatprep.subr.mxu0 %v772
    %909 = vmatpush1.msra.mxu0 %v771
    %910 = vmatprep.subr.mxu0 %v776
    %911 = vmatpush1.msra.mxu0 %v775
    %912 = vmatprep.mubr.f32.mxu0 %v647
    %913 = vmatmul.mubr.f32.gmra.mrb[0].mxu0 %v646
    %v914 = vpop.f32.mrb[0].mxu0
    %v915 = vadd.f32 0.0, %v914
    %v916 = vpop.f32.mrb[0].mxu0
    %v917 = vadd.f32 0.0, %v916
    %918 = vdwg.mxu0
    %v919 = vadd.f32 %v571, %v844
    %v920 = vadd.f32 %v573, %v846
    %v921 = vadd.f32 %v642, %v915
    %v922 = vadd.f32 %v644, %v917
    %v923 = vld [vmem:[#allocation10] sm:$0xff]
    %v924 = vld [vmem:[#allocation10 + $0x8] sm:$0xff]
    %v925 = vld [vmem:[#allocation10 + $0x10] sm:$0xff]
    %v926 = vld [vmem:[#allocation10 + $0x18] sm:$0xff]
    %v927 = vld [vmem:[#allocation10 + $0x20] sm:$0xff]
    %v928 = vld [vmem:[#allocation10 + $0x28] sm:$0xff]
    %v929 = vld [vmem:[#allocation10 + $0x30] sm:$0xff]
    %v930 = vld [vmem:[#allocation10 + $0x38] sm:$0xff]
    %v931 = vld [vmem:[#allocation10 + $0x40] sm:$0xff]
    %v932 = vld [vmem:[#allocation10 + $0x48] sm:$0xff]
    %v933 = vld [vmem:[#allocation10 + $0x50] sm:$0xff]
    %v934 = vld [vmem:[#allocation10 + $0x58] sm:$0xff]
    %v935 = vld [vmem:[#allocation10 + $0x60] sm:$0xff]
    %v936 = vld [vmem:[#allocation10 + $0x68] sm:$0xff]
    %v937 = vld [vmem:[#allocation10 + $0x70] sm:$0xff]
    %v938 = vld [vmem:[#allocation10 + $0x78] sm:$0xff]
    %v939 = vld [vmem:[#allocation10 + $0x80] sm:$0xff]
    %v940 = vld [vmem:[#allocation10 + $0x88] sm:$0xff]
    %v941 = vld [vmem:[#allocation10 + $0x90] sm:$0xff]
    %v942 = vld [vmem:[#allocation10 + $0x98] sm:$0xff]
    %v943 = vld [vmem:[#allocation10 + $0xa0] sm:$0xff]
    %v944 = vld [vmem:[#allocation10 + $0xa8] sm:$0xff]
    %v945 = vld [vmem:[#allocation10 + $0xb0] sm:$0xff]
    %v946 = vld [vmem:[#allocation10 + $0xb8] sm:$0xff]
    %v947 = vld [vmem:[#allocation10 + $0xc0] sm:$0xff]
    %v948 = vld [vmem:[#allocation10 + $0xc8] sm:$0xff]
    %v949 = vld [vmem:[#allocation10 + $0xd0] sm:$0xff]
    %v950 = vld [vmem:[#allocation10 + $0xd8] sm:$0xff]
    %v951 = vld [vmem:[#allocation10 + $0xe0] sm:$0xff]
    %v952 = vld [vmem:[#allocation10 + $0xe8] sm:$0xff]
    %v953 = vld [vmem:[#allocation10 + $0xf0] sm:$0xff]
    %v954 = vld [vmem:[#allocation10 + $0xf8] sm:$0xff]
    %v955 = vld [vmem:[#allocation10 + $0x100] sm:$0xff]
    %v956 = vld [vmem:[#allocation10 + $0x108] sm:$0xff]
    %v957 = vld [vmem:[#allocation10 + $0x110] sm:$0xff]
    %v958 = vld [vmem:[#allocation10 + $0x118] sm:$0xff]
    %v959 = vld [vmem:[#allocation10 + $0x120] sm:$0xff]
    %v960 = vld [vmem:[#allocation10 + $0x128] sm:$0xff]
    %v961 = vld [vmem:[#allocation10 + $0x130] sm:$0xff]
    %v962 = vld [vmem:[#allocation10 + $0x138] sm:$0xff]
    %v963 = vld [vmem:[#allocation10 + $0x140] sm:$0xff]
    %v964 = vld [vmem:[#allocation10 + $0x148] sm:$0xff]
    %v965 = vld [vmem:[#allocation10 + $0x150] sm:$0xff]
    %v966 = vld [vmem:[#allocation10 + $0x158] sm:$0xff]
    %v967 = vld [vmem:[#allocation10 + $0x160] sm:$0xff]
    %v968 = vld [vmem:[#allocation10 + $0x168] sm:$0xff]
    %v969 = vld [vmem:[#allocation10 + $0x170] sm:$0xff]
    %v970 = vld [vmem:[#allocation10 + $0x178] sm:$0xff]
    %v971 = vld [vmem:[#allocation10 + $0x180] sm:$0xff]
    %v972 = vld [vmem:[#allocation10 + $0x188] sm:$0xff]
    %v973 = vld [vmem:[#allocation10 + $0x190] sm:$0xff]
    %v974 = vld [vmem:[#allocation10 + $0x198] sm:$0xff]
    %v975 = vld [vmem:[#allocation10 + $0x1a0] sm:$0xff]
    %v976 = vld [vmem:[#allocation10 + $0x1a8] sm:$0xff]
    %v977 = vld [vmem:[#allocation10 + $0x1b0] sm:$0xff]
    %v978 = vld [vmem:[#allocation10 + $0x1b8] sm:$0xff]
    %v979 = vld [vmem:[#allocation10 + $0x1c0] sm:$0xff]
    %v980 = vld [vmem:[#allocation10 + $0x1c8] sm:$0xff]
    %v981 = vld [vmem:[#allocation10 + $0x1d0] sm:$0xff]
    %v982 = vld [vmem:[#allocation10 + $0x1d8] sm:$0xff]
    %v983 = vld [vmem:[#allocation10 + $0x1e0] sm:$0xff]
    %v984 = vld [vmem:[#allocation10 + $0x1e8] sm:$0xff]
    %v985 = vld [vmem:[#allocation10 + $0x1f0] sm:$0xff]
    %v986 = vld [vmem:[#allocation10 + $0x1f8] sm:$0xff]
    %v987 = vld [vmem:[#allocation10 + $0x200] sm:$0xff]
    %v988 = vld [vmem:[#allocation10 + $0x208] sm:$0xff]
    %v989 = vld [vmem:[#allocation10 + $0x210] sm:$0xff]
    %v990 = vld [vmem:[#allocation10 + $0x218] sm:$0xff]
    %v991 = vld [vmem:[#allocation10 + $0x220] sm:$0xff]
    %v992 = vld [vmem:[#allocation10 + $0x228] sm:$0xff]
    %v993 = vld [vmem:[#allocation10 + $0x230] sm:$0xff]
    %v994 = vld [vmem:[#allocation10 + $0x238] sm:$0xff]
    %v995 = vld [vmem:[#allocation10 + $0x240] sm:$0xff]
    %v996 = vld [vmem:[#allocation10 + $0x248] sm:$0xff]
    %v997 = vld [vmem:[#allocation10 + $0x250] sm:$0xff]
    %v998 = vld [vmem:[#allocation10 + $0x258] sm:$0xff]
    %v999 = vld [vmem:[#allocation10 + $0x260] sm:$0xff]
    %v1000 = vld [vmem:[#allocation10 + $0x268] sm:$0xff]
    %v1001 = vld [vmem:[#allocation10 + $0x270] sm:$0xff]
    %v1002 = vld [vmem:[#allocation10 + $0x278] sm:$0xff]
    %v1003 = vld [vmem:[#allocation10 + $0x280] sm:$0xff]
    %v1004 = vld [vmem:[#allocation10 + $0x288] sm:$0xff]
    %v1005 = vld [vmem:[#allocation10 + $0x290] sm:$0xff]
    %v1006 = vld [vmem:[#allocation10 + $0x298] sm:$0xff]
    %v1007 = vld [vmem:[#allocation10 + $0x2a0] sm:$0xff]
    %v1008 = vld [vmem:[#allocation10 + $0x2a8] sm:$0xff]
    %v1009 = vld [vmem:[#allocation10 + $0x2b0] sm:$0xff]
    %v1010 = vld [vmem:[#allocation10 + $0x2b8] sm:$0xff]
    %v1011 = vld [vmem:[#allocation10 + $0x2c0] sm:$0xff]
    %v1012 = vld [vmem:[#allocation10 + $0x2c8] sm:$0xff]
    %v1013 = vld [vmem:[#allocation10 + $0x2d0] sm:$0xff]
    %v1014 = vld [vmem:[#allocation10 + $0x2d8] sm:$0xff]
    %v1015 = vld [vmem:[#allocation10 + $0x2e0] sm:$0xff]
    %v1016 = vld [vmem:[#allocation10 + $0x2e8] sm:$0xff]
    %v1017 = vld [vmem:[#allocation10 + $0x2f0] sm:$0xff]
    %v1018 = vld [vmem:[#allocation10 + $0x2f8] sm:$0xff]
    %v1019 = vld [vmem:[#allocation10 + $0x300] sm:$0xff]
    %v1020 = vld [vmem:[#allocation10 + $0x308] sm:$0xff]
    %v1021 = vld [vmem:[#allocation10 + $0x310] sm:$0xff]
    %v1022 = vld [vmem:[#allocation10 + $0x318] sm:$0xff]
    %v1023 = vld [vmem:[#allocation10 + $0x320] sm:$0xff]
    %v1024 = vld [vmem:[#allocation10 + $0x328] sm:$0xff]
    %v1025 = vld [vmem:[#allocation10 + $0x330] sm:$0xff]
    %v1026 = vld [vmem:[#allocation10 + $0x338] sm:$0xff]
    %v1027 = vld [vmem:[#allocation10 + $0x340] sm:$0xff]
    %v1028 = vld [vmem:[#allocation10 + $0x348] sm:$0xff]
    %v1029 = vld [vmem:[#allocation10 + $0x350] sm:$0xff]
    %v1030 = vld [vmem:[#allocation10 + $0x358] sm:$0xff]
    %v1031 = vld [vmem:[#allocation10 + $0x360] sm:$0xff]
    %v1032 = vld [vmem:[#allocation10 + $0x368] sm:$0xff]
    %v1033 = vld [vmem:[#allocation10 + $0x370] sm:$0xff]
    %v1034 = vld [vmem:[#allocation10 + $0x378] sm:$0xff]
    %v1035 = vld [vmem:[#allocation10 + $0x380] sm:$0xff]
    %v1036 = vld [vmem:[#allocation10 + $0x388] sm:$0xff]
    %v1037 = vld [vmem:[#allocation10 + $0x390] sm:$0xff]
    %v1038 = vld [vmem:[#allocation10 + $0x398] sm:$0xff]
    %v1039 = vld [vmem:[#allocation10 + $0x3a0] sm:$0xff]
    %v1040 = vld [vmem:[#allocation10 + $0x3a8] sm:$0xff]
    %v1041 = vld [vmem:[#allocation10 + $0x3b0] sm:$0xff]
    %v1042 = vld [vmem:[#allocation10 + $0x3b8] sm:$0xff]
    %v1043 = vld [vmem:[#allocation10 + $0x3c0] sm:$0xff]
    %v1044 = vld [vmem:[#allocation10 + $0x3c8] sm:$0xff]
    %v1045 = vld [vmem:[#allocation10 + $0x3d0] sm:$0xff]
    %v1046 = vld [vmem:[#allocation10 + $0x3d8] sm:$0xff]
    %v1047 = vld [vmem:[#allocation10 + $0x3e0] sm:$0xff]
    %v1048 = vld [vmem:[#allocation10 + $0x3e8] sm:$0xff]
    %v1049 = vld [vmem:[#allocation10 + $0x3f0] sm:$0xff]
    %v1050 = vld [vmem:[#allocation10 + $0x3f8] sm:$0xff]
    %v1051 = vld [vmem:[#allocation11] sm:$0x3]
    %v1053 = vlaneseq
    %v1054 = vshrl.u32 %v1053, 7
    %v1055 = vsub.s32 0, %v1054
    %v1056 = vrot.slane %v1051, %v1055
    %v1057 = vlaneseq
    %v1058 = vshrl.u32 %v1057, 7
    %v1059 = vsub.s32 1, %v1058
    %v1060 = vrot.slane %v1051, %v1059
    %1063 = vmatprep.subr.mxu0 %v924
    %1064 = vmatpush1.msra.mxu0 %v923
    %1065 = vmatprep.subr.mxu0 %v926
    %1066 = vmatpush1.msra.mxu0 %v925
    %1067 = vmatprep.subr.mxu0 %v928
    %1068 = vmatpush1.msra.mxu0 %v927
    %1069 = vmatprep.subr.mxu0 %v930
    %1070 = vmatpush1.msra.mxu0 %v929
    %1071 = vmatprep.subr.mxu0 %v932
    %1072 = vmatpush1.msra.mxu0 %v931
    %1073 = vmatprep.subr.mxu0 %v934
    %1074 = vmatpush1.msra.mxu0 %v933
    %1075 = vmatprep.subr.mxu0 %v936
    %1076 = vmatpush1.msra.mxu0 %v935
    %1077 = vmatprep.subr.mxu0 %v938
    %1078 = vmatpush1.msra.mxu0 %v937
    %1079 = vmatprep.subr.mxu0 %v940
    %1080 = vmatpush1.msra.mxu0 %v939
    %1081 = vmatprep.subr.mxu0 %v942
    %1082 = vmatpush1.msra.mxu0 %v941
    %1083 = vmatprep.subr.mxu0 %v944
    %1084 = vmatpush1.msra.mxu0 %v943
    %1085 = vmatprep.subr.mxu0 %v946
    %1086 = vmatpush1.msra.mxu0 %v945
    %1087 = vmatprep.subr.mxu0 %v948
    %1088 = vmatpush1.msra.mxu0 %v947
    %1089 = vmatprep.subr.mxu0 %v950
    %1090 = vmatpush1.msra.mxu0 %v949
    %1091 = vmatprep.subr.mxu0 %v952
    %1092 = vmatpush1.msra.mxu0 %v951
    %1093 = vmatprep.subr.mxu0 %v954
    %1094 = vmatpush1.msra.mxu0 %v953
    %1095 = vmatprep.subr.mxu0 %v956
    %1096 = vmatpush1.msra.mxu0 %v955
    %1097 = vmatprep.subr.mxu0 %v958
    %1098 = vmatpush1.msra.mxu0 %v957
    %1099 = vmatprep.subr.mxu0 %v960
    %1100 = vmatpush1.msra.mxu0 %v959
    %1101 = vmatprep.subr.mxu0 %v962
    %1102 = vmatpush1.msra.mxu0 %v961
    %1103 = vmatprep.subr.mxu0 %v964
    %1104 = vmatpush1.msra.mxu0 %v963
    %1105 = vmatprep.subr.mxu0 %v966
    %1106 = vmatpush1.msra.mxu0 %v965
    %1107 = vmatprep.subr.mxu0 %v968
    %1108 = vmatpush1.msra.mxu0 %v967
    %1109 = vmatprep.subr.mxu0 %v970
    %1110 = vmatpush1.msra.mxu0 %v969
    %1111 = vmatprep.subr.mxu0 %v972
    %1112 = vmatpush1.msra.mxu0 %v971
    %1113 = vmatprep.subr.mxu0 %v974
    %1114 = vmatpush1.msra.mxu0 %v973
    %1115 = vmatprep.subr.mxu0 %v976
    %1116 = vmatpush1.msra.mxu0 %v975
    %1117 = vmatprep.subr.mxu0 %v978
    %1118 = vmatpush1.msra.mxu0 %v977
    %1119 = vmatprep.subr.mxu0 %v980
    %1120 = vmatpush1.msra.mxu0 %v979
    %1121 = vmatprep.subr.mxu0 %v982
    %1122 = vmatpush1.msra.mxu0 %v981
    %1123 = vmatprep.subr.mxu0 %v984
    %1124 = vmatpush1.msra.mxu0 %v983
    %1125 = vmatprep.subr.mxu0 %v986
    %1126 = vmatpush1.msra.mxu0 %v985
    %1127 = vmatprep.mubr.f32.mxu0 %v920
    %1128 = vmatmul.mubr.f32.gmra.mrb[0].mxu0 %v919
    %v1129 = vpop.f32.mrb[0].mxu0
    %v1130 = vadd.f32 %v1056, %v1129
    %v1131 = vpop.f32.mrb[0].mxu0
    %v1132 = vadd.f32 %v1060, %v1131
    %1133 = vdwg.mxu0
    %1134 = vmatprep.subr.mxu0 %v988
    %1135 = vmatpush1.msra.mxu0 %v987
    %1136 = vmatprep.subr.mxu0 %v990
    %1137 = vmatpush1.msra.mxu0 %v989
    %1138 = vmatprep.subr.mxu0 %v992
    %1139 = vmatpush1.msra.mxu0 %v991
    %1140 = vmatprep.subr.mxu0 %v994
    %1141 = vmatpush1.msra.mxu0 %v993
    %1142 = vmatprep.subr.mxu0 %v996
    %1143 = vmatpush1.msra.mxu0 %v995
    %1144 = vmatprep.subr.mxu0 %v998
    %1145 = vmatpush1.msra.mxu0 %v997
    %1146 = vmatprep.subr.mxu0 %v1000
    %1147 = vmatpush1.msra.mxu0 %v999
    %1148 = vmatprep.subr.mxu0 %v1002
    %1149 = vmatpush1.msra.mxu0 %v1001
    %1150 = vmatprep.subr.mxu0 %v1004
    %1151 = vmatpush1.msra.mxu0 %v1003
    %1152 = vmatprep.subr.mxu0 %v1006
    %1153 = vmatpush1.msra.mxu0 %v1005
    %1154 = vmatprep.subr.mxu0 %v1008
    %1155 = vmatpush1.msra.mxu0 %v1007
    %1156 = vmatprep.subr.mxu0 %v1010
    %1157 = vmatpush1.msra.mxu0 %v1009
    %1158 = vmatprep.subr.mxu0 %v1012
    %1159 = vmatpush1.msra.mxu0 %v1011
    %1160 = vmatprep.subr.mxu0 %v1014
    %1161 = vmatpush1.msra.mxu0 %v1013
    %1162 = vmatprep.subr.mxu0 %v1016
    %1163 = vmatpush1.msra.mxu0 %v1015
    %1164 = vmatprep.subr.mxu0 %v1018
    %1165 = vmatpush1.msra.mxu0 %v1017
    %1166 = vmatprep.subr.mxu0 %v1020
    %1167 = vmatpush1.msra.mxu0 %v1019
    %1168 = vmatprep.subr.mxu0 %v1022
    %1169 = vmatpush1.msra.mxu0 %v1021
    %1170 = vmatprep.subr.mxu0 %v1024
    %1171 = vmatpush1.msra.mxu0 %v1023
    %1172 = vmatprep.subr.mxu0 %v1026
    %1173 = vmatpush1.msra.mxu0 %v1025
    %1174 = vmatprep.subr.mxu0 %v1028
    %1175 = vmatpush1.msra.mxu0 %v1027
    %1176 = vmatprep.subr.mxu0 %v1030
    %1177 = vmatpush1.msra.mxu0 %v1029
    %1178 = vmatprep.subr.mxu0 %v1032
    %1179 = vmatpush1.msra.mxu0 %v1031
    %1180 = vmatprep.subr.mxu0 %v1034
    %1181 = vmatpush1.msra.mxu0 %v1033
    %1182 = vmatprep.subr.mxu0 %v1036
    %1183 = vmatpush1.msra.mxu0 %v1035
    %1184 = vmatprep.subr.mxu0 %v1038
    %1185 = vmatpush1.msra.mxu0 %v1037
    %1186 = vmatprep.subr.mxu0 %v1040
    %1187 = vmatpush1.msra.mxu0 %v1039
    %1188 = vmatprep.subr.mxu0 %v1042
    %1189 = vmatpush1.msra.mxu0 %v1041
    %1190 = vmatprep.subr.mxu0 %v1044
    %1191 = vmatpush1.msra.mxu0 %v1043
    %1192 = vmatprep.subr.mxu0 %v1046
    %1193 = vmatpush1.msra.mxu0 %v1045
    %1194 = vmatprep.subr.mxu0 %v1048
    %1195 = vmatpush1.msra.mxu0 %v1047
    %1196 = vmatprep.subr.mxu0 %v1050
    %1197 = vmatpush1.msra.mxu0 %v1049
    %1198 = vmatprep.mubr.f32.mxu0 %v922
    %1199 = vmatmul.mubr.f32.gmra.mrb[0].mxu0 %v921
    %v1200 = vpop.f32.mrb[0].mxu0
    %v1201 = vadd.f32 %v1130, %v1200
    %v1202 = vpop.f32.mrb[0].mxu0
    %v1203 = vadd.f32 %v1132, %v1202
    %1204 = vdwg.mxu0
    %1205 = vst [vmem:[#allocation13] sm:$0xff] %v1201
    %1206 = vst [vmem:[#allocation13 + $0x8] sm:$0xff] %v1203
    %s1207 = smul.u32 0, 8
    %v1208 = vlaneseq
    %v1209 = vand.u32 %v1208, 127
    %v1210 = vstv %s1207
    %v1211 = vadd.s32 %v1210, %v1209
    %vm1212 = vcmp.lt.s32.totalorder %v1211, 4
    %v1213 = vsel %vm1212, 1, 0
    %v1214 = vcvt.s32.f32 %v1213
    %vm1215 = vcmask 64512
    %v1217 = vsel %vm1215, %v1214, 0
    %1219 = vmatprep.subr.mxu0 %v1203
    %1220 = vmatpush1.msra.mxu0 %v1201
    %1221 = vmatprep.subr.mxu0 0.0
    %1222 = vmatpush1.msra.mxu0 0.0
    %1223 = vmatprep.subr.mxu0 0.0
    %1224 = vmatpush1.msra.mxu0 0.0
    %1225 = vmatprep.subr.mxu0 0.0
    %1226 = vmatpush1.msra.mxu0 0.0
    %1227 = vmatprep.subr.mxu0 0.0
    %1228 = vmatpush1.msra.mxu0 0.0
    %1229 = vmatprep.subr.mxu0 0.0
    %1230 = vmatpush1.msra.mxu0 0.0
    %1231 = vmatprep.subr.mxu0 0.0
    %1232 = vmatpush1.msra.mxu0 0.0
    %1233 = vmatprep.subr.mxu0 0.0
    %1234 = vmatpush1.msra.mxu0 0.0
    %1235 = vmatprep.subr.mxu0 0.0
    %1236 = vmatpush1.msra.mxu0 0.0
    %1237 = vmatprep.subr.mxu0 0.0
    %1238 = vmatpush1.msra.mxu0 0.0
    %1239 = vmatprep.subr.mxu0 0.0
    %1240 = vmatpush1.msra.mxu0 0.0
    %1241 = vmatprep.subr.mxu0 0.0
    %1242 = vmatpush1.msra.mxu0 0.0
    %1243 = vmatprep.subr.mxu0 0.0
    %1244 = vmatpush1.msra.mxu0 0.0
    %1245 = vmatprep.subr.mxu0 0.0
    %1246 = vmatpush1.msra.mxu0 0.0
    %1247 = vmatprep.subr.mxu0 0.0
    %1248 = vmatpush1.msra.mxu0 0.0
    %1249 = vmatprep.subr.mxu0 0.0
    %1250 = vmatpush1.msra.mxu0 0.0
    %1251 = vmatprep.subr.mxu0 0.0
    %1252 = vmatpush1.msra.mxu0 0.0
    %1253 = vmatprep.subr.mxu0 0.0
    %1254 = vmatpush1.msra.mxu0 0.0
    %1255 = vmatprep.subr.mxu0 0.0
    %1256 = vmatpush1.msra.mxu0 0.0
    %1257 = vmatprep.subr.mxu0 0.0
    %1258 = vmatpush1.msra.mxu0 0.0
    %1259 = vmatprep.subr.mxu0 0.0
    %1260 = vmatpush1.msra.mxu0 0.0
    %1261 = vmatprep.subr.mxu0 0.0
    %1262 = vmatpush1.msra.mxu0 0.0
    %1263 = vmatprep.subr.mxu0 0.0
    %1264 = vmatpush1.msra.mxu0 0.0
    %1265 = vmatprep.subr.mxu0 0.0
    %1266 = vmatpush1.msra.mxu0 0.0
    %1267 = vmatprep.subr.mxu0 0.0
    %1268 = vmatpush1.msra.mxu0 0.0
    %1269 = vmatprep.subr.mxu0 0.0
    %1270 = vmatpush1.msra.mxu0 0.0
    %1271 = vmatprep.subr.mxu0 0.0
    %1272 = vmatpush1.msra.mxu0 0.0
    %1273 = vmatprep.subr.mxu0 0.0
    %1274 = vmatpush1.msra.mxu0 0.0
    %1275 = vmatprep.subr.mxu0 0.0
    %1276 = vmatpush1.msra.mxu0 0.0
    %1277 = vmatprep.subr.mxu0 0.0
    %1278 = vmatpush1.msra.mxu0 0.0
    %1279 = vmatprep.subr.mxu0 0.0
    %1280 = vmatpush1.msra.mxu0 0.0
    %1281 = vmatprep.subr.mxu0 0.0
    %1282 = vmatpush1.msra.mxu0 0.0
    %1283 = vmatprep.mubr.f32.mxu0 0.0
    %1284 = vmatmul.mubr.f32.gmra.mrb[0].mxu0 %v1217
    %v1285 = vpop.f32.mrb[0].mxu0
    %v1286 = vadd.f32 0.0, %v1285
    %v1287 = vpop.f32.mrb[0].mxu0
    %v1288 = vadd.f32 0.0, %v1287
    %1289 = vdwg.mxu0
    %v1290 = vmul.f32 %v1201, %v1201
    %v1291 = vmul.f32 %v1203, %v1203
    %1292 = vmatprep.subr.mxu0 %v1291
    %1293 = vmatpush1.msra.mxu0 %v1290
    %1294 = vmatprep.subr.mxu0 0.0
    %1295 = vmatpush1.msra.mxu0 0.0
    %1296 = vmatprep.subr.mxu0 0.0
    %1297 = vmatpush1.msra.mxu0 0.0
    %1298 = vmatprep.subr.mxu0 0.0
    %1299 = vmatpush1.msra.mxu0 0.0
    %1300 = vmatprep.subr.mxu0 0.0
    %1301 = vmatpush1.msra.mxu0 0.0
    %1302 = vmatprep.subr.mxu0 0.0
    %1303 = vmatpush1.msra.mxu0 0.0
    %1304 = vmatprep.subr.mxu0 0.0
    %1305 = vmatpush1.msra.mxu0 0.0
    %1306 = vmatprep.subr.mxu0 0.0
    %1307 = vmatpush1.msra.mxu0 0.0
    %1308 = vmatprep.subr.mxu0 0.0
    %1309 = vmatpush1.msra.mxu0 0.0
    %1310 = vmatprep.subr.mxu0 0.0
    %1311 = vmatpush1.msra.mxu0 0.0
    %1312 = vmatprep.subr.mxu0 0.0
    %1313 = vmatpush1.msra.mxu0 0.0
    %1314 = vmatprep.subr.mxu0 0.0
    %1315 = vmatpush1.msra.mxu0 0.0
    %1316 = vmatprep.subr.mxu0 0.0
    %1317 = vmatpush1.msra.mxu0 0.0
    %1318 = vmatprep.subr.mxu0 0.0
    %1319 = vmatpush1.msra.mxu0 0.0
    %1320 = vmatprep.subr.mxu0 0.0
    %1321 = vmatpush1.msra.mxu0 0.0
    %1322 = vmatprep.subr.mxu0 0.0
    %1323 = vmatpush1.msra.mxu0 0.0
    %1324 = vmatprep.subr.mxu0 0.0
    %1325 = vmatpush1.msra.mxu0 0.0
    %1326 = vmatprep.subr.mxu0 0.0
    %1327 = vmatpush1.msra.mxu0 0.0
    %1328 = vmatprep.subr.mxu0 0.0
    %1329 = vmatpush1.msra.mxu0 0.0
    %1330 = vmatprep.subr.mxu0 0.0
    %1331 = vmatpush1.msra.mxu0 0.0
    %1332 = vmatprep.subr.mxu0 0.0
    %1333 = vmatpush1.msra.mxu0 0.0
    %1334 = vmatprep.subr.mxu0 0.0
    %1335 = vmatpush1.msra.mxu0 0.0
    %1336 = vmatprep.subr.mxu0 0.0
    %1337 = vmatpush1.msra.mxu0 0.0
    %1338 = vmatprep.subr.mxu0 0.0
    %1339 = vmatpush1.msra.mxu0 0.0
    %1340 = vmatprep.subr.mxu0 0.0
    %1341 = vmatpush1.msra.mxu0 0.0
    %1342 = vmatprep.subr.mxu0 0.0
    %1343 = vmatpush1.msra.mxu0 0.0
    %1344 = vmatprep.subr.mxu0 0.0
    %1345 = vmatpush1.msra.mxu0 0.0
    %1346 = vmatprep.subr.mxu0 0.0
    %1347 = vmatpush1.msra.mxu0 0.0
    %1348 = vmatprep.subr.mxu0 0.0
    %1349 = vmatpush1.msra.mxu0 0.0
    %1350 = vmatprep.subr.mxu0 0.0
    %1351 = vmatpush1.msra.mxu0 0.0
    %1352 = vmatprep.subr.mxu0 0.0
    %1353 = vmatpush1.msra.mxu0 0.0
    %1354 = vmatprep.subr.mxu0 0.0
    %1355 = vmatpush1.msra.mxu0 0.0
    %1356 = vmatprep.mubr.f32.mxu0 0.0
    %1357 = vmatmul.mubr.f32.gmra.mrb[0].mxu0 %v1217
    %v1358 = vpop.f32.mrb[0].mxu0
    %v1359 = vadd.f32 0.0, %v1358
    %v1360 = vpop.f32.mrb[0].mxu0
    %v1361 = vadd.f32 0.0, %v1360
    %1362 = vdwg.mxu0
    %v1365 = vrot.slane %v1359, 7
    %v1366 = vrot.slane %v1361, 7
    %vm1369 = vcmask 1040384
    %v1370 = vsel %vm1369, %v1286, %v1365
    %v1371 = vsel %vm1369, %v1288, %v1366
    %v1374 = vcombine.low %v1370, %v1371
    %v1376 = vunpack.c.l.s4 1983009808
    %v1377 = vunpack.c.0.s8 %v1376
    %v1378 = vlaneseq
    %v1379 = vshrl.u32 %v1378, 7
    %v1380 = vsub.s32 %v1377, %v1379
    %v1381 = vrot.slane %v1374, %v1380
    %1383 = vst [vmem:[#allocation14] sm:$0xf] %v1381
    // Predicated region
    $region50: #{tpu_custom_call.1} parent=1 // pred_check
      _
    $region51: #{tpu_custom_call.1} parent=1 // pred_check_branch
      %1385 = sbr.rel (0) target = $region53
    $region52: #{tpu_custom_call.1} parent=1 // pred_region
      %s1387 = ssub.s32 256, 256
      %1388 = vsyncadd [#allocation4], %s1387
      %s1390 = sshll.u32 [#allocation13], 4
      %s1391 = int_to_ptr.vmem [resolvable:$true] %s1390
      %1393 = dma.vmem_to_hbm [thread:$0]  %s1391, 256, %s6, [#allocation4]
    $region53: #{tpu_custom_call.1} parent=1 // pred_fallthru
      _
    // Predicated region
    $region54: #{tpu_custom_call.1} parent=1 // pred_check
      _
    $region55: #{tpu_custom_call.1} parent=1 // pred_check_branch
      %1395 = sbr.rel (0) target = $region57
    $region56: #{tpu_custom_call.1} parent=1 // pred_region
      %s1397 = ssub.s32 64, 64
      %1398 = vsyncadd [#allocation15], %s1397
      %s1400 = sshll.u32 [#allocation14], 4
      %s1401 = int_to_ptr.vmem [resolvable:$true] %s1400
      %1403 = dma.vmem_to_hbm [thread:$0]  %s1401, 64, %s7, [#allocation15]
    $region57: #{tpu_custom_call.1} parent=1 // pred_fallthru
      _
    // Predicated region
    $region58: #{tpu_custom_call.1} parent=1 // pred_check
      _
    $region59: #{tpu_custom_call.1} parent=1 // pred_check_branch
      %1405 = sbr.rel (0) target = $region61
    $region60: #{tpu_custom_call.1} parent=1 // pred_region
      %1406 = dma.done [#allocation4], 256
    $region61: #{tpu_custom_call.1} parent=1 // pred_fallthru
      _
    // Predicated region
    $region62: #{tpu_custom_call.1} parent=1 // pred_check
      _
    $region63: #{tpu_custom_call.1} parent=1 // pred_check_branch
      %1408 = sbr.rel (0) target = $region65
    $region64: #{tpu_custom_call.1} parent=1 // pred_region
      %1409 = dma.done [#allocation15], 64
    $region65: #{tpu_custom_call.1} parent=1 // pred_fallthru
      _
    %1410 = vsyncpa [#allocation3], 1
    %1411 = vsyncpa [#allocation6], 1
    %1412 = vsyncpa [#allocation9], 1
    %1413 = vsyncpa [#allocation12], 1
    %1414 = vsyncpa [#allocation4], 1
    %1415 = vsyncpa [#allocation15], 1

</llo_original>
